<compile_context>
chip_gen: v6e
topology: v6e:2x2x1
jax: 0.10.0
libtpu: 0.0.40
codegen_flags: <defaults>
</compile_context>

<pallas_src>
import functools
import math

import jax
import jax.numpy as jnp
from jax.experimental import pallas as pl
from jax.experimental.pallas import tpu as pltpu

_INV_PI = 1.0 / math.pi


def _mm(a, b):
    """bf16 MXU matmul with f32 accumulation."""
    return jnp.dot(a.astype(jnp.bfloat16), b.astype(jnp.bfloat16),
                   preferred_element_type=jnp.float32)


def resst_kernel(x_ref, w2_ref, b3_ref, b2_ref,
                 lnw_ref, lnb_ref,
                 f1w_ref, f1b_ref, f2w_ref, f2b_ref,
                 qkvw_ref, pw_ref, pb_ref, o_ref, *, num_heads):
    # One grid step == one batch element.  Everything is channels-major (C, L).
    x = x_ref[0]                                   # (C, L) f32
    C, L = x.shape
    hd = C // num_heads

    # Folded conv chain: res1 == res2 == conv(x); res3 = conv(res2) = W2@x + b3.
    res3 = _mm(w2_ref[...], x) + b3_ref[...]       # (C, L) f32

    # ---- block-diagonal head mask, built in-kernel (no integer division) ----
    ri = jax.lax.broadcasted_iota(jnp.int32, (C, C), 0)
    cj = jax.lax.broadcasted_iota(jnp.int32, (C, C), 1)
    hr = jnp.zeros((C, C), jnp.int32)
    hc = jnp.zeros((C, C), jnp.int32)
    for h in range(1, num_heads):                  # unrolled at trace time
        b = h * hd
        hr = hr + (ri >= b).astype(jnp.int32)
        hc = hc + (cj >= b).astype(jnp.int32)
    bd = (hr == hc).astype(jnp.float32)            # (C, C) 0/1 same-head mask

    def head_l2_normalize(t):
        # per-head sum of squares per token via block-diag mask on the MXU,
        # broadcast back to (C, L) in the same matmul; rsqrt on the EUP.
        ss = _mm(bd, t * t)
        return t * jax.lax.rsqrt(ss + 1e-12)

    # ---- SSS attention branch ----
    qkv = _mm(qkvw_ref[...], res3)                 # (3C, L); fused projection
    q = qkv[0:C]                                   # sublane slices (free views)
    k = qkv[C:2 * C]
    v = qkv[2 * C:3 * C]

    q_n = head_l2_normalize(q)
    k_n = head_l2_normalize(k)

    # attn_t[d, d'] = sum_l v[d, l] * k_n[d', l]   (== per-head (k^T v)^T)
    # contraction over the lane axis of both operands -> no XLU transpose.
    attn_t = jax.lax.dot_general(
        v.astype(jnp.bfloat16), k_n.astype(jnp.bfloat16),
        dimension_numbers=(((1,), (1,)), ((), ())),
        preferred_element_type=jnp.float32) * bd   # (C, C)

    y = 0.5 * v + _INV_PI * _mm(attn_t, q_n)       # (C, L)
    y = head_l2_normalize(y)

    # ---- MLP branch (LayerNorm over channels -> fc1 -> SiLU -> fc2) ----
    # computed late so its temporaries have short live ranges.
    mu = jnp.mean(res3, axis=0, keepdims=True)               # (1, L)
    var = jnp.mean((res3 - mu) ** 2, axis=0, keepdims=True)  # (1, L)
    xn = (res3 - mu) * jax.lax.rsqrt(var + 1e-5)
    xn = xn * lnw_ref[...] + lnb_ref[...]
    h1 = _mm(f1w_ref[...], xn) + f1b_ref[...]                # (hid, L)
    h1 = h1 * jax.nn.sigmoid(h1)                             # SiLU (EUP)
    mid = _mm(f2w_ref[...], h1) + f2b_ref[...]               # (C, L)

    y = y + mid
    xa = _mm(pw_ref[...], y) + pb_ref[...]                   # proj, (C, L)

    # ---- residual sum + final shared conv (folded) ----
    # out = conv(res1 + res2 + res4) = 2*res3 + W2 @ xa + b2
    o_ref[0] = 2.0 * res3 + _mm(w2_ref[...], xa) + b2_ref[...]


def resst_forward(x_nchw, params, num_heads=8):
    B, C, H, W = x_nchw.shape
    L = H * W
    hid = params['fc1_w'].shape[0]

    x_cl = x_nchw.reshape(B, C, L)                 # free reshape (channels-major)

    # fold the shared 1x1 conv chain on the host (f32), then cast for the MXU
    cw = params['conv_w']                          # (C, C)  (out, in)
    cb = params['conv_b']                          # (C, 1)
    w2 = cw @ cw
    cwb = cw @ cb
    b3 = cwb + cb
    b2 = cwb - cb

    bf = lambda a: a.astype(jnp.bfloat16)
    rep2 = lambda b: (0, 0)

    kernel = functools.partial(resst_kernel, num_heads=num_heads)

    out = pl.pallas_call(
        kernel,
        out_shape=jax.ShapeDtypeStruct((B, C, L), jnp.float32),
        grid=(B,),
        in_specs=[
            pl.BlockSpec((1, C, L), lambda b: (b, 0, 0)),   # x (channels-major)
            pl.BlockSpec((C, C), rep2),      # W2 = Wc @ Wc (bf16)
            pl.BlockSpec((C, 1), rep2),      # b3 = Wc@bc + bc
            pl.BlockSpec((C, 1), rep2),      # b2 = Wc@bc - bc
            pl.BlockSpec((C, 1), rep2),      # LN gamma
            pl.BlockSpec((C, 1), rep2),      # LN beta
            pl.BlockSpec((hid, C), rep2),    # fc1 W (bf16)
            pl.BlockSpec((hid, 1), rep2),    # fc1 b
            pl.BlockSpec((C, hid), rep2),    # fc2 W (bf16)
            pl.BlockSpec((C, 1), rep2),      # fc2 b
            pl.BlockSpec((3 * C, C), rep2),  # qkv W (bf16), rows = [q|k|v]
            pl.BlockSpec((C, C), rep2),      # proj W (bf16)
            pl.BlockSpec((C, 1), rep2),      # proj b
        ],
        out_specs=pl.BlockSpec((1, C, L), lambda b: (b, 0, 0)),
        compiler_params=pltpu.CompilerParams(
            dimension_semantics=("parallel",),        # batch -> both TCs on v7x
            vmem_limit_bytes=32 * 1024 * 1024),
    )(x_cl, bf(w2), b3, b2,
      params['ln_w'], params['ln_b'],
      bf(params['fc1_w']), params['fc1_b'],
      bf(params['fc2_w']), params['fc2_b'],
      bf(params['qkv_w']), bf(params['proj_w']), params['proj_b'])

    return out.reshape(B, C, H, W)


def init_params(key, C, mlp_ratio=4.0):
    hid = int(C * mlp_ratio)
    ks = jax.random.split(key, 9)

    def u(k, shape, fan_in):
        bound = 1.0 / (fan_in ** 0.5)
        return jax.random.uniform(k, shape, jnp.float32, -bound, bound)

    return dict(
        conv_w=u(ks[0], (C, C), C),            # Conv2d(C,C,1) weight (out, in)
        conv_b=u(ks[1], (C, 1), C),
        ln_w=jnp.ones((C, 1), jnp.float32),    # LayerNorm defaults
        ln_b=jnp.zeros((C, 1), jnp.float32),
        fc1_w=u(ks[2], (hid, C), C),
        fc1_b=u(ks[3], (hid, 1), C),
        fc2_w=u(ks[4], (C, hid), hid),
        fc2_b=u(ks[5], (C, 1), hid),
        qkv_w=u(ks[6], (3 * C, C), C),         # qkv_bias=False, rows = [q|k|v]
        proj_w=u(ks[7], (C, C), C),
        proj_b=u(ks[8], (C, 1), C),
    )
    # TODO(synk): SSS.dconv is constructed in __init__ but never used in
    # forward(); it is intentionally omitted.  Dropouts have p=0 (identity).


if __name__ == "__main__":
    key = jax.random.PRNGKey(0)
    kx, kp = jax.random.split(key)

    B, C, H, W = 2, 32, 16, 16      # dim=32, num_heads=8 -> head_dim=4, L=256
    x = jax.random.normal(kx, (B, C, H, W), jnp.float32)
    params = init_params(kp, C)

    out = jax.jit(resst_forward)(x, params)
    out = jax.block_until_ready(out)

    assert out.shape == (B, C, H, W), out.shape
    assert bool(jnp.all(jnp.isfinite(out)))
    print("KERNEL_OK")
</pallas_src>

<mosaic_0001>
module attributes {stable_mosaic.version = 11 : i64} {
  func.func @resst_kernel(%arg0: i32, %arg1: memref<1x32x256xf32, #tpu.memory_space<vmem>>, %arg2: memref<32x32xbf16, #tpu.memory_space<vmem>>, %arg3: memref<32x1xf32, #tpu.memory_space<vmem>>, %arg4: memref<32x1xf32, #tpu.memory_space<vmem>>, %arg5: memref<32x1xf32, #tpu.memory_space<vmem>>, %arg6: memref<32x1xf32, #tpu.memory_space<vmem>>, %arg7: memref<128x32xbf16, #tpu.memory_space<vmem>>, %arg8: memref<128x1xf32, #tpu.memory_space<vmem>>, %arg9: memref<32x128xbf16, #tpu.memory_space<vmem>>, %arg10: memref<32x1xf32, #tpu.memory_space<vmem>>, %arg11: memref<96x32xbf16, #tpu.memory_space<vmem>>, %arg12: memref<32x32xbf16, #tpu.memory_space<vmem>>, %arg13: memref<32x1xf32, #tpu.memory_space<vmem>>, %arg14: memref<1x32x256xf32, #tpu.memory_space<vmem>>) attributes {dimension_semantics = [#tpu.dimension_semantics<parallel>], iteration_bounds = array<i64: 2>, scalar_prefetch = 0 : i64, scratch_operands = 0 : i64, tpu.core_type = #tpu.core_type<tc>, window_params = [{transform_indices = @transform_0, window_bounds = array<i64: 1, 32, 256>}, {pipeline_mode = #tpu.pipeline_mode<synchronous>, transform_indices = @transform_1, window_bounds = array<i64: 32, 32>}, {pipeline_mode = #tpu.pipeline_mode<synchronous>, transform_indices = @transform_2, window_bounds = array<i64: 32, 1>}, {pipeline_mode = #tpu.pipeline_mode<synchronous>, transform_indices = @transform_3, window_bounds = array<i64: 32, 1>}, {pipeline_mode = #tpu.pipeline_mode<synchronous>, transform_indices = @transform_4, window_bounds = array<i64: 32, 1>}, {pipeline_mode = #tpu.pipeline_mode<synchronous>, transform_indices = @transform_5, window_bounds = array<i64: 32, 1>}, {pipeline_mode = #tpu.pipeline_mode<synchronous>, transform_indices = @transform_6, window_bounds = array<i64: 128, 32>}, {pipeline_mode = #tpu.pipeline_mode<synchronous>, transform_indices = @transform_7, window_bounds = array<i64: 128, 1>}, {pipeline_mode = #tpu.pipeline_mode<synchronous>, transform_indices = @transform_8, window_bounds = array<i64: 32, 128>}, {pipeline_mode = #tpu.pipeline_mode<synchronous>, transform_indices = @transform_9, window_bounds = array<i64: 32, 1>}, {pipeline_mode = #tpu.pipeline_mode<synchronous>, transform_indices = @transform_10, window_bounds = array<i64: 96, 32>}, {pipeline_mode = #tpu.pipeline_mode<synchronous>, transform_indices = @transform_11, window_bounds = array<i64: 32, 32>}, {pipeline_mode = #tpu.pipeline_mode<synchronous>, transform_indices = @transform_12, window_bounds = array<i64: 32, 1>}, {transform_indices = @transform_13, window_bounds = array<i64: 1, 32, 256>}]} {
    %c0 = arith.constant 0 : index
    %c0_0 = arith.constant 0 : index
    %c0_1 = arith.constant 0 : index
    %0 = vector.load %arg1[%c0, %c0_0, %c0_1] : memref<1x32x256xf32, #tpu.memory_space<vmem>>, vector<1x32x256xf32>
    %1 = vector.shape_cast %0 : vector<1x32x256xf32> to vector<32x256xf32>
    %c0_2 = arith.constant 0 : index
    %c0_3 = arith.constant 0 : index
    %2 = vector.load %arg2[%c0_2, %c0_3] : memref<32x32xbf16, #tpu.memory_space<vmem>>, vector<32x32xbf16>
    %3 = arith.truncf %1 : vector<32x256xf32> to vector<32x256xbf16>
    %cst = arith.constant dense<0.000000e+00> : vector<32x256xf32>
    %4 = tpu.matmul %2, %3, %cst {dimension_numbers = #tpu.dot_dimension_numbers<[1], [0], [0], [1], [0, 0, 1, 1], [], []>} : vector<32x32xbf16>, vector<32x256xbf16>, vector<32x256xf32> -> vector<32x256xf32>
    %c0_4 = arith.constant 0 : index
    %c0_5 = arith.constant 0 : index
    %5 = vector.load %arg3[%c0_4, %c0_5] : memref<32x1xf32, #tpu.memory_space<vmem>>, vector<32x1xf32>
    %6 = vector.broadcast %5 : vector<32x1xf32> to vector<32x256xf32>
    %7 = arith.addf %4, %6 : vector<32x256xf32>
    %8 = tpu.iota {dimensions = array<i32: 0>} : vector<32x32xi32>
    %9 = tpu.iota {dimensions = array<i32: 1>} : vector<32x32xi32>
    %c0_i32 = arith.constant 0 : i32
    %10 = vector.broadcast %c0_i32 : i32 to vector<32x32xi32>
    %c0_i32_6 = arith.constant 0 : i32
    %11 = vector.broadcast %c0_i32_6 : i32 to vector<32x32xi32>
    %c4_i32 = arith.constant 4 : i32
    %12 = vector.broadcast %c4_i32 : i32 to vector<32x32xi32>
    %13 = arith.cmpi sge, %8, %12 : vector<32x32xi32>
    %14 = arith.extui %13 : vector<32x32xi1> to vector<32x32xi32>
    %15 = arith.addi %10, %14 : vector<32x32xi32>
    %c4_i32_7 = arith.constant 4 : i32
    %16 = vector.broadcast %c4_i32_7 : i32 to vector<32x32xi32>
    %17 = arith.cmpi sge, %9, %16 : vector<32x32xi32>
    %18 = arith.extui %17 : vector<32x32xi1> to vector<32x32xi32>
    %19 = arith.addi %11, %18 : vector<32x32xi32>
    %c8_i32 = arith.constant 8 : i32
    %20 = vector.broadcast %c8_i32 : i32 to vector<32x32xi32>
    %21 = arith.cmpi sge, %8, %20 : vector<32x32xi32>
    %22 = arith.extui %21 : vector<32x32xi1> to vector<32x32xi32>
    %23 = arith.addi %15, %22 : vector<32x32xi32>
    %c8_i32_8 = arith.constant 8 : i32
    %24 = vector.broadcast %c8_i32_8 : i32 to vector<32x32xi32>
    %25 = arith.cmpi sge, %9, %24 : vector<32x32xi32>
    %26 = arith.extui %25 : vector<32x32xi1> to vector<32x32xi32>
    %27 = arith.addi %19, %26 : vector<32x32xi32>
    %c12_i32 = arith.constant 12 : i32
    %28 = vector.broadcast %c12_i32 : i32 to vector<32x32xi32>
    %29 = arith.cmpi sge, %8, %28 : vector<32x32xi32>
    %30 = arith.extui %29 : vector<32x32xi1> to vector<32x32xi32>
    %31 = arith.addi %23, %30 : vector<32x32xi32>
    %c12_i32_9 = arith.constant 12 : i32
    %32 = vector.broadcast %c12_i32_9 : i32 to vector<32x32xi32>
    %33 = arith.cmpi sge, %9, %32 : vector<32x32xi32>
    %34 = arith.extui %33 : vector<32x32xi1> to vector<32x32xi32>
    %35 = arith.addi %27, %34 : vector<32x32xi32>
    %c16_i32 = arith.constant 16 : i32
    %36 = vector.broadcast %c16_i32 : i32 to vector<32x32xi32>
    %37 = arith.cmpi sge, %8, %36 : vector<32x32xi32>
    %38 = arith.extui %37 : vector<32x32xi1> to vector<32x32xi32>
    %39 = arith.addi %31, %38 : vector<32x32xi32>
    %c16_i32_10 = arith.constant 16 : i32
    %40 = vector.broadcast %c16_i32_10 : i32 to vector<32x32xi32>
    %41 = arith.cmpi sge, %9, %40 : vector<32x32xi32>
    %42 = arith.extui %41 : vector<32x32xi1> to vector<32x32xi32>
    %43 = arith.addi %35, %42 : vector<32x32xi32>
    %c20_i32 = arith.constant 20 : i32
    %44 = vector.broadcast %c20_i32 : i32 to vector<32x32xi32>
    %45 = arith.cmpi sge, %8, %44 : vector<32x32xi32>
    %46 = arith.extui %45 : vector<32x32xi1> to vector<32x32xi32>
    %47 = arith.addi %39, %46 : vector<32x32xi32>
    %c20_i32_11 = arith.constant 20 : i32
    %48 = vector.broadcast %c20_i32_11 : i32 to vector<32x32xi32>
    %49 = arith.cmpi sge, %9, %48 : vector<32x32xi32>
    %50 = arith.extui %49 : vector<32x32xi1> to vector<32x32xi32>
    %51 = arith.addi %43, %50 : vector<32x32xi32>
    %c24_i32 = arith.constant 24 : i32
    %52 = vector.broadcast %c24_i32 : i32 to vector<32x32xi32>
    %53 = arith.cmpi sge, %8, %52 : vector<32x32xi32>
    %54 = arith.extui %53 : vector<32x32xi1> to vector<32x32xi32>
    %55 = arith.addi %47, %54 : vector<32x32xi32>
    %c24_i32_12 = arith.constant 24 : i32
    %56 = vector.broadcast %c24_i32_12 : i32 to vector<32x32xi32>
    %57 = arith.cmpi sge, %9, %56 : vector<32x32xi32>
    %58 = arith.extui %57 : vector<32x32xi1> to vector<32x32xi32>
    %59 = arith.addi %51, %58 : vector<32x32xi32>
    %c28_i32 = arith.constant 28 : i32
    %60 = vector.broadcast %c28_i32 : i32 to vector<32x32xi32>
    %61 = arith.cmpi sge, %8, %60 : vector<32x32xi32>
    %62 = arith.extui %61 : vector<32x32xi1> to vector<32x32xi32>
    %63 = arith.addi %55, %62 : vector<32x32xi32>
    %c28_i32_13 = arith.constant 28 : i32
    %64 = vector.broadcast %c28_i32_13 : i32 to vector<32x32xi32>
    %65 = arith.cmpi sge, %9, %64 : vector<32x32xi32>
    %66 = arith.extui %65 : vector<32x32xi1> to vector<32x32xi32>
    %67 = arith.addi %59, %66 : vector<32x32xi32>
    %68 = arith.cmpi eq, %63, %67 : vector<32x32xi32>
    %69 = arith.extui %68 : vector<32x32xi1> to vector<32x32xi32>
    %70 = arith.sitofp %69 : vector<32x32xi32> to vector<32x32xf32>
    %c0_14 = arith.constant 0 : index
    %c0_15 = arith.constant 0 : index
    %71 = vector.load %arg11[%c0_14, %c0_15] : memref<96x32xbf16, #tpu.memory_space<vmem>>, vector<96x32xbf16>
    %72 = arith.truncf %7 : vector<32x256xf32> to vector<32x256xbf16>
    %cst_16 = arith.constant dense<0.000000e+00> : vector<96x256xf32>
    %73 = tpu.matmul %71, %72, %cst_16 {dimension_numbers = #tpu.dot_dimension_numbers<[1], [0], [0], [1], [0, 0, 1, 1], [], []>} : vector<96x32xbf16>, vector<32x256xbf16>, vector<96x256xf32> -> vector<96x256xf32>
    %74 = vector.extract_strided_slice %73 {offsets = [0, 0], sizes = [32, 256], strides = [1, 1]} : vector<96x256xf32> to vector<32x256xf32>
    %75 = vector.extract_strided_slice %73 {offsets = [32, 0], sizes = [32, 256], strides = [1, 1]} : vector<96x256xf32> to vector<32x256xf32>
    %76 = vector.extract_strided_slice %73 {offsets = [64, 0], sizes = [32, 256], strides = [1, 1]} : vector<96x256xf32> to vector<32x256xf32>
    %77 = arith.mulf %74, %74 : vector<32x256xf32>
    %78 = arith.truncf %70 : vector<32x32xf32> to vector<32x32xbf16>
    %79 = arith.truncf %77 : vector<32x256xf32> to vector<32x256xbf16>
    %cst_17 = arith.constant dense<0.000000e+00> : vector<32x256xf32>
    %80 = tpu.matmul %78, %79, %cst_17 {dimension_numbers = #tpu.dot_dimension_numbers<[1], [0], [0], [1], [0, 0, 1, 1], [], []>} : vector<32x32xbf16>, vector<32x256xbf16>, vector<32x256xf32> -> vector<32x256xf32>
    %cst_18 = arith.constant 9.99999996E-13 : f32
    %81 = vector.broadcast %cst_18 : f32 to vector<32x256xf32>
    %82 = arith.addf %80, %81 : vector<32x256xf32>
    %83 = math.rsqrt %82 : vector<32x256xf32>
    %84 = arith.mulf %74, %83 : vector<32x256xf32>
    %85 = arith.mulf %75, %75 : vector<32x256xf32>
    %86 = arith.truncf %70 : vector<32x32xf32> to vector<32x32xbf16>
    %87 = arith.truncf %85 : vector<32x256xf32> to vector<32x256xbf16>
    %cst_19 = arith.constant dense<0.000000e+00> : vector<32x256xf32>
    %88 = tpu.matmul %86, %87, %cst_19 {dimension_numbers = #tpu.dot_dimension_numbers<[1], [0], [0], [1], [0, 0, 1, 1], [], []>} : vector<32x32xbf16>, vector<32x256xbf16>, vector<32x256xf32> -> vector<32x256xf32>
    %cst_20 = arith.constant 9.99999996E-13 : f32
    %89 = vector.broadcast %cst_20 : f32 to vector<32x256xf32>
    %90 = arith.addf %88, %89 : vector<32x256xf32>
    %91 = math.rsqrt %90 : vector<32x256xf32>
    %92 = arith.mulf %75, %91 : vector<32x256xf32>
    %93 = arith.truncf %76 : vector<32x256xf32> to vector<32x256xbf16>
    %94 = arith.truncf %92 : vector<32x256xf32> to vector<32x256xbf16>
    %cst_21 = arith.constant dense<0.000000e+00> : vector<32x32xf32>
    %95 = tpu.matmul %93, %94, %cst_21 {dimension_numbers = #tpu.dot_dimension_numbers<[1], [1], [0], [0], [0, 0, 1, 0], [], []>} : vector<32x256xbf16>, vector<32x256xbf16>, vector<32x32xf32> -> vector<32x32xf32>
    %96 = arith.mulf %95, %70 : vector<32x32xf32>
    %cst_22 = arith.constant 5.000000e-01 : f32
    %97 = vector.broadcast %cst_22 : f32 to vector<32x256xf32>
    %98 = arith.mulf %97, %76 : vector<32x256xf32>
    %99 = arith.truncf %96 : vector<32x32xf32> to vector<32x32xbf16>
    %100 = arith.truncf %84 : vector<32x256xf32> to vector<32x256xbf16>
    %cst_23 = arith.constant dense<0.000000e+00> : vector<32x256xf32>
    %101 = tpu.matmul %99, %100, %cst_23 {dimension_numbers = #tpu.dot_dimension_numbers<[1], [0], [0], [1], [0, 0, 1, 1], [], []>} : vector<32x32xbf16>, vector<32x256xbf16>, vector<32x256xf32> -> vector<32x256xf32>
    %cst_24 = arith.constant 0.318309873 : f32
    %102 = vector.broadcast %cst_24 : f32 to vector<32x256xf32>
    %103 = arith.mulf %102, %101 : vector<32x256xf32>
    %104 = arith.addf %98, %103 : vector<32x256xf32>
    %105 = arith.mulf %104, %104 : vector<32x256xf32>
    %106 = arith.truncf %70 : vector<32x32xf32> to vector<32x32xbf16>
    %107 = arith.truncf %105 : vector<32x256xf32> to vector<32x256xbf16>
    %cst_25 = arith.constant dense<0.000000e+00> : vector<32x256xf32>
    %108 = tpu.matmul %106, %107, %cst_25 {dimension_numbers = #tpu.dot_dimension_numbers<[1], [0], [0], [1], [0, 0, 1, 1], [], []>} : vector<32x32xbf16>, vector<32x256xbf16>, vector<32x256xf32> -> vector<32x256xf32>
    %cst_26 = arith.constant 9.99999996E-13 : f32
    %109 = vector.broadcast %cst_26 : f32 to vector<32x256xf32>
    %110 = arith.addf %108, %109 : vector<32x256xf32>
    %111 = math.rsqrt %110 : vector<32x256xf32>
    %112 = arith.mulf %104, %111 : vector<32x256xf32>
    %cst_27 = arith.constant dense<0.000000e+00> : vector<256xf32>
    %113 = vector.multi_reduction <add>, %7, %cst_27 [0] : vector<32x256xf32> to vector<256xf32>
    %114 = vector.shape_cast %113 : vector<256xf32> to vector<1x256xf32>
    %cst_28 = arith.constant 3.200000e+01 : f32
    %115 = vector.broadcast %cst_28 : f32 to vector<1x256xf32>
    %116 = arith.divf %114, %115 : vector<1x256xf32>
    %117 = vector.broadcast %116 : vector<1x256xf32> to vector<32x256xf32>
    %118 = arith.subf %7, %117 : vector<32x256xf32>
    %119 = arith.mulf %118, %118 : vector<32x256xf32>
    %cst_29 = arith.constant dense<0.000000e+00> : vector<256xf32>
    %120 = vector.multi_reduction <add>, %119, %cst_29 [0] : vector<32x256xf32> to vector<256xf32>
    %121 = vector.shape_cast %120 : vector<256xf32> to vector<1x256xf32>
    %cst_30 = arith.constant 3.200000e+01 : f32
    %122 = vector.broadcast %cst_30 : f32 to vector<1x256xf32>
    %123 = arith.divf %121, %122 : vector<1x256xf32>
    %124 = vector.broadcast %116 : vector<1x256xf32> to vector<32x256xf32>
    %125 = arith.subf %7, %124 : vector<32x256xf32>
    %cst_31 = arith.constant 9.99999974E-6 : f32
    %126 = vector.broadcast %cst_31 : f32 to vector<1x256xf32>
    %127 = arith.addf %123, %126 : vector<1x256xf32>
    %128 = math.rsqrt %127 : vector<1x256xf32>
    %129 = vector.broadcast %128 : vector<1x256xf32> to vector<32x256xf32>
    %130 = arith.mulf %125, %129 : vector<32x256xf32>
    %c0_32 = arith.constant 0 : index
    %c0_33 = arith.constant 0 : index
    %131 = vector.load %arg5[%c0_32, %c0_33] : memref<32x1xf32, #tpu.memory_space<vmem>>, vector<32x1xf32>
    %132 = vector.broadcast %131 : vector<32x1xf32> to vector<32x256xf32>
    %133 = arith.mulf %130, %132 : vector<32x256xf32>
    %c0_34 = arith.constant 0 : index
    %c0_35 = arith.constant 0 : index
    %134 = vector.load %arg6[%c0_34, %c0_35] : memref<32x1xf32, #tpu.memory_space<vmem>>, vector<32x1xf32>
    %135 = vector.broadcast %134 : vector<32x1xf32> to vector<32x256xf32>
    %136 = arith.addf %133, %135 : vector<32x256xf32>
    %c0_36 = arith.constant 0 : index
    %c0_37 = arith.constant 0 : index
    %137 = vector.load %arg7[%c0_36, %c0_37] : memref<128x32xbf16, #tpu.memory_space<vmem>>, vector<128x32xbf16>
    %138 = arith.truncf %136 : vector<32x256xf32> to vector<32x256xbf16>
    %cst_38 = arith.constant dense<0.000000e+00> : vector<128x256xf32>
    %139 = tpu.matmul %137, %138, %cst_38 {dimension_numbers = #tpu.dot_dimension_numbers<[1], [0], [0], [1], [0, 0, 1, 1], [], []>} : vector<128x32xbf16>, vector<32x256xbf16>, vector<128x256xf32> -> vector<128x256xf32>
    %c0_39 = arith.constant 0 : index
    %c0_40 = arith.constant 0 : index
    %140 = vector.load %arg8[%c0_39, %c0_40] : memref<128x1xf32, #tpu.memory_space<vmem>>, vector<128x1xf32>
    %141 = vector.broadcast %140 : vector<128x1xf32> to vector<128x256xf32>
    %142 = arith.addf %139, %141 : vector<128x256xf32>
    %143 = arith.negf %142 : vector<128x256xf32>
    %144 = math.exp %143 : vector<128x256xf32>
    %cst_41 = arith.constant 1.000000e+00 : f32
    %145 = vector.broadcast %cst_41 : f32 to vector<128x256xf32>
    %146 = arith.addf %145, %144 : vector<128x256xf32>
    %147 = arith.divf %145, %146 : vector<128x256xf32>
    %148 = arith.mulf %142, %147 : vector<128x256xf32>
    %c0_42 = arith.constant 0 : index
    %c0_43 = arith.constant 0 : index
    %149 = vector.load %arg9[%c0_42, %c0_43] : memref<32x128xbf16, #tpu.memory_space<vmem>>, vector<32x128xbf16>
    %150 = arith.truncf %148 : vector<128x256xf32> to vector<128x256xbf16>
    %cst_44 = arith.constant dense<0.000000e+00> : vector<32x256xf32>
    %151 = tpu.matmul %149, %150, %cst_44 {dimension_numbers = #tpu.dot_dimension_numbers<[1], [0], [0], [1], [0, 0, 1, 1], [], []>} : vector<32x128xbf16>, vector<128x256xbf16>, vector<32x256xf32> -> vector<32x256xf32>
    %c0_45 = arith.constant 0 : index
    %c0_46 = arith.constant 0 : index
    %152 = vector.load %arg10[%c0_45, %c0_46] : memref<32x1xf32, #tpu.memory_space<vmem>>, vector<32x1xf32>
    %153 = vector.broadcast %152 : vector<32x1xf32> to vector<32x256xf32>
    %154 = arith.addf %151, %153 : vector<32x256xf32>
    %155 = arith.addf %112, %154 : vector<32x256xf32>
    %c0_47 = arith.constant 0 : index
    %c0_48 = arith.constant 0 : index
    %156 = vector.load %arg12[%c0_47, %c0_48] : memref<32x32xbf16, #tpu.memory_space<vmem>>, vector<32x32xbf16>
    %157 = arith.truncf %155 : vector<32x256xf32> to vector<32x256xbf16>
    %cst_49 = arith.constant dense<0.000000e+00> : vector<32x256xf32>
    %158 = tpu.matmul %156, %157, %cst_49 {dimension_numbers = #tpu.dot_dimension_numbers<[1], [0], [0], [1], [0, 0, 1, 1], [], []>} : vector<32x32xbf16>, vector<32x256xbf16>, vector<32x256xf32> -> vector<32x256xf32>
    %c0_50 = arith.constant 0 : index
    %c0_51 = arith.constant 0 : index
    %159 = vector.load %arg13[%c0_50, %c0_51] : memref<32x1xf32, #tpu.memory_space<vmem>>, vector<32x1xf32>
    %160 = vector.broadcast %159 : vector<32x1xf32> to vector<32x256xf32>
    %161 = arith.addf %158, %160 : vector<32x256xf32>
    %cst_52 = arith.constant 2.000000e+00 : f32
    %162 = vector.broadcast %cst_52 : f32 to vector<32x256xf32>
    %163 = arith.mulf %162, %7 : vector<32x256xf32>
    %c0_53 = arith.constant 0 : index
    %c0_54 = arith.constant 0 : index
    %164 = vector.load %arg2[%c0_53, %c0_54] : memref<32x32xbf16, #tpu.memory_space<vmem>>, vector<32x32xbf16>
    %165 = arith.truncf %161 : vector<32x256xf32> to vector<32x256xbf16>
    %cst_55 = arith.constant dense<0.000000e+00> : vector<32x256xf32>
    %166 = tpu.matmul %164, %165, %cst_55 {dimension_numbers = #tpu.dot_dimension_numbers<[1], [0], [0], [1], [0, 0, 1, 1], [], []>} : vector<32x32xbf16>, vector<32x256xbf16>, vector<32x256xf32> -> vector<32x256xf32>
    %167 = arith.addf %163, %166 : vector<32x256xf32>
    %c0_56 = arith.constant 0 : index
    %c0_57 = arith.constant 0 : index
    %168 = vector.load %arg4[%c0_56, %c0_57] : memref<32x1xf32, #tpu.memory_space<vmem>>, vector<32x1xf32>
    %169 = vector.broadcast %168 : vector<32x1xf32> to vector<32x256xf32>
    %170 = arith.addf %167, %169 : vector<32x256xf32>
    %c0_58 = arith.constant 0 : index
    %c0_59 = arith.constant 0 : index
    %c0_60 = arith.constant 0 : index
    %171 = vector.load %arg14[%c0_58, %c0_59, %c0_60] : memref<1x32x256xf32, #tpu.memory_space<vmem>>, vector<1x32x256xf32>
    %172 = vector.shape_cast %171 : vector<1x32x256xf32> to vector<32x256xf32>
    %173 = vector.shape_cast %170 : vector<32x256xf32> to vector<1x32x256xf32>
    tpu.vector_store %arg14[%c0_58, %c0_59, %c0_60], %173 {strides = array<i32>} : memref<1x32x256xf32, #tpu.memory_space<vmem>>, vector<1x32x256xf32>,
    return
  }
  func.func @transform_0(%arg0: i32) -> (i32, i32, i32) {
    %c0_i32 = arith.constant 0 : i32
    %c0_i32_0 = arith.constant 0 : i32
    %c0_i32_1 = arith.constant 0 : i32
    return %arg0, %c0_i32, %c0_i32_0 : i32, i32, i32
  }
  func.func @transform_1(%arg0: i32) -> (i32, i32) {
    %c0_i32 = arith.constant 0 : i32
    %c0_i32_0 = arith.constant 0 : i32
    %c0_i32_1 = arith.constant 0 : i32
    return %c0_i32, %c0_i32_0 : i32, i32
  }
  func.func @transform_2(%arg0: i32) -> (i32, i32) {
    %c0_i32 = arith.constant 0 : i32
    %c0_i32_0 = arith.constant 0 : i32
    %c0_i32_1 = arith.constant 0 : i32
    return %c0_i32, %c0_i32_0 : i32, i32
  }
  func.func @transform_3(%arg0: i32) -> (i32, i32) {
    %c0_i32 = arith.constant 0 : i32
    %c0_i32_0 = arith.constant 0 : i32
    %c0_i32_1 = arith.constant 0 : i32
    return %c0_i32, %c0_i32_0 : i32, i32
  }
  func.func @transform_4(%arg0: i32) -> (i32, i32) {
    %c0_i32 = arith.constant 0 : i32
    %c0_i32_0 = arith.constant 0 : i32
    %c0_i32_1 = arith.constant 0 : i32
    return %c0_i32, %c0_i32_0 : i32, i32
  }
  func.func @transform_5(%arg0: i32) -> (i32, i32) {
    %c0_i32 = arith.constant 0 : i32
    %c0_i32_0 = arith.constant 0 : i32
    %c0_i32_1 = arith.constant 0 : i32
    return %c0_i32, %c0_i32_0 : i32, i32
  }
  func.func @transform_6(%arg0: i32) -> (i32, i32) {
    %c0_i32 = arith.constant 0 : i32
    %c0_i32_0 = arith.constant 0 : i32
    %c0_i32_1 = arith.constant 0 : i32
    return %c0_i32, %c0_i32_0 : i32, i32
  }
  func.func @transform_7(%arg0: i32) -> (i32, i32) {
    %c0_i32 = arith.constant 0 : i32
    %c0_i32_0 = arith.constant 0 : i32
    %c0_i32_1 = arith.constant 0 : i32
    return %c0_i32, %c0_i32_0 : i32, i32
  }
  func.func @transform_8(%arg0: i32) -> (i32, i32) {
    %c0_i32 = arith.constant 0 : i32
    %c0_i32_0 = arith.constant 0 : i32
    %c0_i32_1 = arith.constant 0 : i32
    return %c0_i32, %c0_i32_0 : i32, i32
  }
  func.func @transform_9(%arg0: i32) -> (i32, i32) {
    %c0_i32 = arith.constant 0 : i32
    %c0_i32_0 = arith.constant 0 : i32
    %c0_i32_1 = arith.constant 0 : i32
    return %c0_i32, %c0_i32_0 : i32, i32
  }
  func.func @transform_10(%arg0: i32) -> (i32, i32) {
    %c0_i32 = arith.constant 0 : i32
    %c0_i32_0 = arith.constant 0 : i32
    %c0_i32_1 = arith.constant 0 : i32
    return %c0_i32, %c0_i32_0 : i32, i32
  }
  func.func @transform_11(%arg0: i32) -> (i32, i32) {
    %c0_i32 = arith.constant 0 : i32
    %c0_i32_0 = arith.constant 0 : i32
    %c0_i32_1 = arith.constant 0 : i32
    return %c0_i32, %c0_i32_0 : i32, i32
  }
  func.func @transform_12(%arg0: i32) -> (i32, i32) {
    %c0_i32 = arith.constant 0 : i32
    %c0_i32_0 = arith.constant 0 : i32
    %c0_i32_1 = arith.constant 0 : i32
    return %c0_i32, %c0_i32_0 : i32, i32
  }
  func.func @transform_13(%arg0: i32) -> (i32, i32, i32) {
    %c0_i32 = arith.constant 0 : i32
    %c0_i32_0 = arith.constant 0 : i32
    %c0_i32_1 = arith.constant 0 : i32
    return %arg0, %c0_i32, %c0_i32_0 : i32, i32, i32
  }
}

</mosaic_0001>

<llo_original>
// kernel: resst_forward.1
$region0: #{resst_forward.1}
  #allocation0 [shape = 'u32[]', space=smem, size = 0x4, offset = 0x4, fixed_abs, tag = 'smem constant byte address 0x4 - core index']
  #allocation1 [shape = 'u32[144,128]{1,0:T(1,128)}', space=vmem, size = 0x12000, scoped, tag = 'internal scratch']
  %s0 = inlined_call_operand.vmem [shape: f32[2,32,256], index: 0, kind: input, shape index: {}]
  %s1 = inlined_call_operand.vmem [shape: bf16[32,32], index: 1, kind: input, shape index: {}]
  %s2 = inlined_call_operand.vmem [shape: f32[32,1], index: 2, kind: input, shape index: {}]
  %s3 = inlined_call_operand.vmem [shape: f32[32,1], index: 3, kind: input, shape index: {}]
  %s4 = inlined_call_operand.vmem [shape: f32[32,1], index: 4, kind: input, shape index: {}]
  %s5 = inlined_call_operand.vmem [shape: f32[32,1], index: 5, kind: input, shape index: {}]
  %s6 = inlined_call_operand.vmem [shape: bf16[128,32], index: 6, kind: input, shape index: {}]
  %s7 = inlined_call_operand.vmem [shape: f32[128,1], index: 7, kind: input, shape index: {}]
  %s8 = inlined_call_operand.vmem [shape: bf16[32,128], index: 8, kind: input, shape index: {}]
  %s9 = inlined_call_operand.vmem [shape: f32[32,1], index: 9, kind: input, shape index: {}]
  %s10 = inlined_call_operand.vmem [shape: bf16[96,32], index: 10, kind: input, shape index: {}]
  %s11 = inlined_call_operand.vmem [shape: bf16[32,32], index: 11, kind: input, shape index: {}]
  %s12 = inlined_call_operand.vmem [shape: f32[32,1], index: 12, kind: input, shape index: {}]
  %s13 = inlined_call_operand.vmem [shape: f32[2,32,256], index: 13, kind: output, shape index: {}]
  %s14 = sld [smem:[#allocation0]]
  $region85: #{resst_forward.1} parent=0
    _
  %s16 = ssub.s32 1, %s14
  %s17 = scalar_select 0, %s16, %s14
  loop: start=0, step=1, limit=4
  $region2: #{resst_forward.1} parent=0 // loop_pre_header
    _
  $region3: #{resst_forward.1} parent=0 // loop_header
    %s19 = sphi 0, %s23
    %p20 = scmp.ge.s32.totalorder %s19, 4
    %s29 = sphi 0, %s31
    %s32 = sphi 0, %s29
    %s33 = sphi 0, %s32
    %s49 = sphi 0, %s33
    %s53 = sphi 0, %s53
    %s55 = sphi 0, %s53
    %s56 = sphi 0, %s55
    %s70 = sphi 0, %s56
    %s74 = sphi 0, %s74
    %s76 = sphi 0, %s74
    %s77 = sphi 0, %s76
    %s91 = sphi 0, %s77
    %s95 = sphi 0, %s95
    %s97 = sphi 0, %s95
    %s98 = sphi 0, %s97
    %s112 = sphi 0, %s98
    %s116 = sphi 0, %s116
    %s118 = sphi 0, %s116
    %s119 = sphi 0, %s118
    %s133 = sphi 0, %s119
    %s137 = sphi 0, %s137
    %s139 = sphi 0, %s137
    %s140 = sphi 0, %s139
    %s154 = sphi 0, %s140
    %s158 = sphi 0, %s158
    %s160 = sphi 0, %s158
    %s161 = sphi 0, %s160
    %s175 = sphi 0, %s161
    %s179 = sphi 0, %s179
    %s181 = sphi 0, %s179
    %s182 = sphi 0, %s181
    %s196 = sphi 0, %s182
    %s200 = sphi 0, %s200
    %s202 = sphi 0, %s200
    %s203 = sphi 0, %s202
    %s217 = sphi 0, %s203
    %s221 = sphi 0, %s221
    %s223 = sphi 0, %s221
    %s224 = sphi 0, %s223
    %s238 = sphi 0, %s224
    %s242 = sphi 0, %s242
    %s244 = sphi 0, %s242
    %s245 = sphi 0, %s244
    %s259 = sphi 0, %s245
    %s263 = sphi 0, %s263
    %s265 = sphi 0, %s263
    %s266 = sphi 0, %s265
    %s280 = sphi 0, %s266
    %s284 = sphi 0, %s284
    %s286 = sphi 0, %s284
    %s287 = sphi 0, %s286
    %s301 = sphi 0, %s287
    %s307 = sphi 0, %s309
    %s310 = sphi 0, %s307
    %s311 = sphi 0, %s310
    %s327 = sphi 0, %s311
  $region4: #{resst_forward.1} parent=0 // loop_header_branch
    %22 = sbr.rel (%p20) target = $region8
  $region5: #{resst_forward.1} parent=0 // loop_body
    %s24 = ssub.s32 %s19, 1
    %s25 = ssub.s32 %s19, 2
    %s26 = sadd.s32 %s19, 1
    %s27 = ssub.s32 %s19, %s26
    %p28 = scmp.eq.s32.totalorder %s27, 0
    %s30 = sadd.s32 %s29, 1
    %s31 = scalar_select %p28, %s29, %s30
    %p34 = pneg %p28
    %p35 = scmp.eq.s32.totalorder %s19, 1
    %p36 = por %p34, %p35
    %p37 = scmp.ne.s32.totalorder %s29, %s32
    %p38 = scmp.eq.s32.totalorder %s19, 0
    %p39 = por %p37, %p38
    %p40 = scmp.ne.s32.totalorder %s29, %s32
    %p41 = scmp.eq.s32.totalorder %s24, 1
    %p42 = por %p40, %p41
    %p43 = scmp.ne.s32.totalorder %s32, %s33
    %p44 = scmp.eq.s32.totalorder %s24, 0
    %p45 = por %p43, %p44
    %p46 = scmp.ne.s32.totalorder %s32, %s33
    %p47 = scmp.eq.s32.totalorder %s25, 1
    %p48 = por %p46, %p47
    %p50 = scmp.ne.s32.totalorder %s33, %s49
    %p51 = scmp.eq.s32.totalorder %s25, 0
    %p52 = por %p50, %p51
    %s54 = sadd.s32 %s53, 1
    %p57 = scmp.eq.s32.totalorder %s19, 1
    %p58 = scmp.ne.s32.totalorder %s53, %s55
    %p59 = scmp.eq.s32.totalorder %s19, 0
    %p60 = por %p58, %p59
    %p61 = scmp.ne.s32.totalorder %s53, %s55
    %p62 = scmp.eq.s32.totalorder %s24, 1
    %p63 = por %p61, %p62
    %p64 = scmp.ne.s32.totalorder %s55, %s56
    %p65 = scmp.eq.s32.totalorder %s24, 0
    %p66 = por %p64, %p65
    %p67 = scmp.ne.s32.totalorder %s55, %s56
    %p68 = scmp.eq.s32.totalorder %s25, 1
    %p69 = por %p67, %p68
    %p71 = scmp.ne.s32.totalorder %s56, %s70
    %p72 = scmp.eq.s32.totalorder %s25, 0
    %p73 = por %p71, %p72
    %s75 = sadd.s32 %s74, 1
    %p78 = scmp.eq.s32.totalorder %s19, 1
    %p79 = scmp.ne.s32.totalorder %s74, %s76
    %p80 = scmp.eq.s32.totalorder %s19, 0
    %p81 = por %p79, %p80
    %p82 = scmp.ne.s32.totalorder %s74, %s76
    %p83 = scmp.eq.s32.totalorder %s24, 1
    %p84 = por %p82, %p83
    %p85 = scmp.ne.s32.totalorder %s76, %s77
    %p86 = scmp.eq.s32.totalorder %s24, 0
    %p87 = por %p85, %p86
    %p88 = scmp.ne.s32.totalorder %s76, %s77
    %p89 = scmp.eq.s32.totalorder %s25, 1
    %p90 = por %p88, %p89
    %p92 = scmp.ne.s32.totalorder %s77, %s91
    %p93 = scmp.eq.s32.totalorder %s25, 0
    %p94 = por %p92, %p93
    %s96 = sadd.s32 %s95, 1
    %p99 = scmp.eq.s32.totalorder %s19, 1
    %p100 = scmp.ne.s32.totalorder %s95, %s97
    %p101 = scmp.eq.s32.totalorder %s19, 0
    %p102 = por %p100, %p101
    %p103 = scmp.ne.s32.totalorder %s95, %s97
    %p104 = scmp.eq.s32.totalorder %s24, 1
    %p105 = por %p103, %p104
    %p106 = scmp.ne.s32.totalorder %s97, %s98
    %p107 = scmp.eq.s32.totalorder %s24, 0
    %p108 = por %p106, %p107
    %p109 = scmp.ne.s32.totalorder %s97, %s98
    %p110 = scmp.eq.s32.totalorder %s25, 1
    %p111 = por %p109, %p110
    %p113 = scmp.ne.s32.totalorder %s98, %s112
    %p114 = scmp.eq.s32.totalorder %s25, 0
    %p115 = por %p113, %p114
    %s117 = sadd.s32 %s116, 1
    %p120 = scmp.eq.s32.totalorder %s19, 1
    %p121 = scmp.ne.s32.totalorder %s116, %s118
    %p122 = scmp.eq.s32.totalorder %s19, 0
    %p123 = por %p121, %p122
    %p124 = scmp.ne.s32.totalorder %s116, %s118
    %p125 = scmp.eq.s32.totalorder %s24, 1
    %p126 = por %p124, %p125
    %p127 = scmp.ne.s32.totalorder %s118, %s119
    %p128 = scmp.eq.s32.totalorder %s24, 0
    %p129 = por %p127, %p128
    %p130 = scmp.ne.s32.totalorder %s118, %s119
    %p131 = scmp.eq.s32.totalorder %s25, 1
    %p132 = por %p130, %p131
    %p134 = scmp.ne.s32.totalorder %s119, %s133
    %p135 = scmp.eq.s32.totalorder %s25, 0
    %p136 = por %p134, %p135
    %s138 = sadd.s32 %s137, 1
    %p141 = scmp.eq.s32.totalorder %s19, 1
    %p142 = scmp.ne.s32.totalorder %s137, %s139
    %p143 = scmp.eq.s32.totalorder %s19, 0
    %p144 = por %p142, %p143
    %p145 = scmp.ne.s32.totalorder %s137, %s139
    %p146 = scmp.eq.s32.totalorder %s24, 1
    %p147 = por %p145, %p146
    %p148 = scmp.ne.s32.totalorder %s139, %s140
    %p149 = scmp.eq.s32.totalorder %s24, 0
    %p150 = por %p148, %p149
    %p151 = scmp.ne.s32.totalorder %s139, %s140
    %p152 = scmp.eq.s32.totalorder %s25, 1
    %p153 = por %p151, %p152
    %p155 = scmp.ne.s32.totalorder %s140, %s154
    %p156 = scmp.eq.s32.totalorder %s25, 0
    %p157 = por %p155, %p156
    %s159 = sadd.s32 %s158, 1
    %p162 = scmp.eq.s32.totalorder %s19, 1
    %p163 = scmp.ne.s32.totalorder %s158, %s160
    %p164 = scmp.eq.s32.totalorder %s19, 0
    %p165 = por %p163, %p164
    %p166 = scmp.ne.s32.totalorder %s158, %s160
    %p167 = scmp.eq.s32.totalorder %s24, 1
    %p168 = por %p166, %p167
    %p169 = scmp.ne.s32.totalorder %s160, %s161
    %p170 = scmp.eq.s32.totalorder %s24, 0
    %p171 = por %p169, %p170
    %p172 = scmp.ne.s32.totalorder %s160, %s161
    %p173 = scmp.eq.s32.totalorder %s25, 1
    %p174 = por %p172, %p173
    %p176 = scmp.ne.s32.totalorder %s161, %s175
    %p177 = scmp.eq.s32.totalorder %s25, 0
    %p178 = por %p176, %p177
    %s180 = sadd.s32 %s179, 1
    %p183 = scmp.eq.s32.totalorder %s19, 1
    %p184 = scmp.ne.s32.totalorder %s179, %s181
    %p185 = scmp.eq.s32.totalorder %s19, 0
    %p186 = por %p184, %p185
    %p187 = scmp.ne.s32.totalorder %s179, %s181
    %p188 = scmp.eq.s32.totalorder %s24, 1
    %p189 = por %p187, %p188
    %p190 = scmp.ne.s32.totalorder %s181, %s182
    %p191 = scmp.eq.s32.totalorder %s24, 0
    %p192 = por %p190, %p191
    %p193 = scmp.ne.s32.totalorder %s181, %s182
    %p194 = scmp.eq.s32.totalorder %s25, 1
    %p195 = por %p193, %p194
    %p197 = scmp.ne.s32.totalorder %s182, %s196
    %p198 = scmp.eq.s32.totalorder %s25, 0
    %p199 = por %p197, %p198
    %s201 = sadd.s32 %s200, 1
    %p204 = scmp.eq.s32.totalorder %s19, 1
    %p205 = scmp.ne.s32.totalorder %s200, %s202
    %p206 = scmp.eq.s32.totalorder %s19, 0
    %p207 = por %p205, %p206
    %p208 = scmp.ne.s32.totalorder %s200, %s202
    %p209 = scmp.eq.s32.totalorder %s24, 1
    %p210 = por %p208, %p209
    %p211 = scmp.ne.s32.totalorder %s202, %s203
    %p212 = scmp.eq.s32.totalorder %s24, 0
    %p213 = por %p211, %p212
    %p214 = scmp.ne.s32.totalorder %s202, %s203
    %p215 = scmp.eq.s32.totalorder %s25, 1
    %p216 = por %p214, %p215
    %p218 = scmp.ne.s32.totalorder %s203, %s217
    %p219 = scmp.eq.s32.totalorder %s25, 0
    %p220 = por %p218, %p219
    %s222 = sadd.s32 %s221, 1
    %p225 = scmp.eq.s32.totalorder %s19, 1
    %p226 = scmp.ne.s32.totalorder %s221, %s223
    %p227 = scmp.eq.s32.totalorder %s19, 0
    %p228 = por %p226, %p227
    %p229 = scmp.ne.s32.totalorder %s221, %s223
    %p230 = scmp.eq.s32.totalorder %s24, 1
    %p231 = por %p229, %p230
    %p232 = scmp.ne.s32.totalorder %s223, %s224
    %p233 = scmp.eq.s32.totalorder %s24, 0
    %p234 = por %p232, %p233
    %p235 = scmp.ne.s32.totalorder %s223, %s224
    %p236 = scmp.eq.s32.totalorder %s25, 1
    %p237 = por %p235, %p236
    %p239 = scmp.ne.s32.totalorder %s224, %s238
    %p240 = scmp.eq.s32.totalorder %s25, 0
    %p241 = por %p239, %p240
    %s243 = sadd.s32 %s242, 1
    %p246 = scmp.eq.s32.totalorder %s19, 1
    %p247 = scmp.ne.s32.totalorder %s242, %s244
    %p248 = scmp.eq.s32.totalorder %s19, 0
    %p249 = por %p247, %p248
    %p250 = scmp.ne.s32.totalorder %s242, %s244
    %p251 = scmp.eq.s32.totalorder %s24, 1
    %p252 = por %p250, %p251
    %p253 = scmp.ne.s32.totalorder %s244, %s245
    %p254 = scmp.eq.s32.totalorder %s24, 0
    %p255 = por %p253, %p254
    %p256 = scmp.ne.s32.totalorder %s244, %s245
    %p257 = scmp.eq.s32.totalorder %s25, 1
    %p258 = por %p256, %p257
    %p260 = scmp.ne.s32.totalorder %s245, %s259
    %p261 = scmp.eq.s32.totalorder %s25, 0
    %p262 = por %p260, %p261
    %s264 = sadd.s32 %s263, 1
    %p267 = scmp.eq.s32.totalorder %s19, 1
    %p268 = scmp.ne.s32.totalorder %s263, %s265
    %p269 = scmp.eq.s32.totalorder %s19, 0
    %p270 = por %p268, %p269
    %p271 = scmp.ne.s32.totalorder %s263, %s265
    %p272 = scmp.eq.s32.totalorder %s24, 1
    %p273 = por %p271, %p272
    %p274 = scmp.ne.s32.totalorder %s265, %s266
    %p275 = scmp.eq.s32.totalorder %s24, 0
    %p276 = por %p274, %p275
    %p277 = scmp.ne.s32.totalorder %s265, %s266
    %p278 = scmp.eq.s32.totalorder %s25, 1
    %p279 = por %p277, %p278
    %p281 = scmp.ne.s32.totalorder %s266, %s280
    %p282 = scmp.eq.s32.totalorder %s25, 0
    %p283 = por %p281, %p282
    %s285 = sadd.s32 %s284, 1
    %p288 = scmp.eq.s32.totalorder %s19, 1
    %p289 = scmp.ne.s32.totalorder %s284, %s286
    %p290 = scmp.eq.s32.totalorder %s19, 0
    %p291 = por %p289, %p290
    %p292 = scmp.ne.s32.totalorder %s284, %s286
    %p293 = scmp.eq.s32.totalorder %s24, 1
    %p294 = por %p292, %p293
    %p295 = scmp.ne.s32.totalorder %s286, %s287
    %p296 = scmp.eq.s32.totalorder %s24, 0
    %p297 = por %p295, %p296
    %p298 = scmp.ne.s32.totalorder %s286, %s287
    %p299 = scmp.eq.s32.totalorder %s25, 1
    %p300 = por %p298, %p299
    %p302 = scmp.ne.s32.totalorder %s287, %s301
    %p303 = scmp.eq.s32.totalorder %s25, 0
    %p304 = por %p302, %p303
    %s305 = ssub.s32 %s19, %s26
    %p306 = scmp.eq.s32.totalorder %s305, 0
    %s308 = sadd.s32 %s307, 1
    %s309 = scalar_select %p306, %s307, %s308
    %p312 = pneg %p306
    %p313 = scmp.eq.s32.totalorder %s19, 1
    %p314 = por %p312, %p313
    %p315 = scmp.ne.s32.totalorder %s307, %s310
    %p316 = scmp.eq.s32.totalorder %s19, 0
    %p317 = por %p315, %p316
    %p318 = scmp.ne.s32.totalorder %s307, %s310
    %p319 = scmp.eq.s32.totalorder %s24, 1
    %p320 = por %p318, %p319
    %p321 = scmp.ne.s32.totalorder %s310, %s311
    %p322 = scmp.eq.s32.totalorder %s24, 0
    %p323 = por %p321, %p322
    %p324 = scmp.ne.s32.totalorder %s310, %s311
    %p325 = scmp.eq.s32.totalorder %s25, 1
    %p326 = por %p324, %p325
    %p328 = scmp.ne.s32.totalorder %s311, %s327
    %p329 = scmp.eq.s32.totalorder %s25, 0
    %p330 = por %p328, %p329
    %p331 = scmp.le.s32.totalorder 1, %s19
    %p332 = scmp.lt.s32.totalorder %s19, 3
    %p333 = pnand %p331, %p332
    %p334 = pneg %p333
    // Predicated region
    $region9: #{resst_forward.1} parent=5 // pred_check
      _
    $region10: #{resst_forward.1} parent=5 // pred_check_branch
      %336 = sbr.rel (%p333) target = $region12
    $region11: #{resst_forward.1} parent=5 // pred_region
      %s337 = ssub.s32 %s19, 1
      // Predicated region
      $region13: #{resst_forward.1} parent=11 // pred_check
        %p338 = pneg %p66
      $region14: #{resst_forward.1} parent=11 // pred_check_branch
        %340 = sbr.rel (%p338) target = $region16
      $region15: #{resst_forward.1} parent=11 // pred_region
        _
      $region16: #{resst_forward.1} parent=11 // pred_fallthru
        _
      // Predicated region
      $region17: #{resst_forward.1} parent=11 // pred_check
        %p341 = pneg %p87
      $region18: #{resst_forward.1} parent=11 // pred_check_branch
        %343 = sbr.rel (%p341) target = $region20
      $region19: #{resst_forward.1} parent=11 // pred_region
        _
      $region20: #{resst_forward.1} parent=11 // pred_fallthru
        _
      // Predicated region
      $region21: #{resst_forward.1} parent=11 // pred_check
        %p344 = pneg %p108
      $region22: #{resst_forward.1} parent=11 // pred_check_branch
        %346 = sbr.rel (%p344) target = $region24
      $region23: #{resst_forward.1} parent=11 // pred_region
        _
      $region24: #{resst_forward.1} parent=11 // pred_fallthru
        _
      // Predicated region
      $region25: #{resst_forward.1} parent=11 // pred_check
        %p347 = pneg %p129
      $region26: #{resst_forward.1} parent=11 // pred_check_branch
        %349 = sbr.rel (%p347) target = $region28
      $region27: #{resst_forward.1} parent=11 // pred_region
        _
      $region28: #{resst_forward.1} parent=11 // pred_fallthru
        _
      // Predicated region
      $region29: #{resst_forward.1} parent=11 // pred_check
        %p350 = pneg %p150
      $region30: #{resst_forward.1} parent=11 // pred_check_branch
        %352 = sbr.rel (%p350) target = $region32
      $region31: #{resst_forward.1} parent=11 // pred_region
        _
      $region32: #{resst_forward.1} parent=11 // pred_fallthru
        _
      // Predicated region
      $region33: #{resst_forward.1} parent=11 // pred_check
        %p353 = pneg %p171
      $region34: #{resst_forward.1} parent=11 // pred_check_branch
        %355 = sbr.rel (%p353) target = $region36
      $region35: #{resst_forward.1} parent=11 // pred_region
        _
      $region36: #{resst_forward.1} parent=11 // pred_fallthru
        _
      // Predicated region
      $region37: #{resst_forward.1} parent=11 // pred_check
        %p356 = pneg %p192
      $region38: #{resst_forward.1} parent=11 // pred_check_branch
        %358 = sbr.rel (%p356) target = $region40
      $region39: #{resst_forward.1} parent=11 // pred_region
        _
      $region40: #{resst_forward.1} parent=11 // pred_fallthru
        _
      // Predicated region
      $region41: #{resst_forward.1} parent=11 // pred_check
        %p359 = pneg %p213
      $region42: #{resst_forward.1} parent=11 // pred_check_branch
        %361 = sbr.rel (%p359) target = $region44
      $region43: #{resst_forward.1} parent=11 // pred_region
        _
      $region44: #{resst_forward.1} parent=11 // pred_fallthru
        _
      // Predicated region
      $region45: #{resst_forward.1} parent=11 // pred_check
        %p362 = pneg %p234
      $region46: #{resst_forward.1} parent=11 // pred_check_branch
        %364 = sbr.rel (%p362) target = $region48
      $region47: #{resst_forward.1} parent=11 // pred_region
        _
      $region48: #{resst_forward.1} parent=11 // pred_fallthru
        _
      // Predicated region
      $region49: #{resst_forward.1} parent=11 // pred_check
        %p365 = pneg %p255
      $region50: #{resst_forward.1} parent=11 // pred_check_branch
        %367 = sbr.rel (%p365) target = $region52
      $region51: #{resst_forward.1} parent=11 // pred_region
        _
      $region52: #{resst_forward.1} parent=11 // pred_fallthru
        _
      // Predicated region
      $region53: #{resst_forward.1} parent=11 // pred_check
        %p368 = pneg %p276
      $region54: #{resst_forward.1} parent=11 // pred_check_branch
        %370 = sbr.rel (%p368) target = $region56
      $region55: #{resst_forward.1} parent=11 // pred_region
        _
      $region56: #{resst_forward.1} parent=11 // pred_fallthru
        _
      // Predicated region
      $region57: #{resst_forward.1} parent=11 // pred_check
        %p371 = pneg %p297
      $region58: #{resst_forward.1} parent=11 // pred_check_branch
        %373 = sbr.rel (%p371) target = $region60
      $region59: #{resst_forward.1} parent=11 // pred_region
        _
      $region60: #{resst_forward.1} parent=11 // pred_fallthru
        _
    $region12: #{resst_forward.1} parent=5 // pred_fallthru
      _
    %p374 = scmp.lt.s32.totalorder %s19, 2
    // Predicated region
    $region61: #{resst_forward.1} parent=5 // pred_check
      %p375 = pneg %p374
    $region62: #{resst_forward.1} parent=5 // pred_check_branch
      %377 = sbr.rel (%p375) target = $region64
    $region63: #{resst_forward.1} parent=5 // pred_region
      // Predicated region
      $region65: #{resst_forward.1} parent=63 // pred_check
        %p378 = pneg %p39
      $region66: #{resst_forward.1} parent=63 // pred_check_branch
        %380 = sbr.rel (%p378) target = $region68
      $region67: #{resst_forward.1} parent=63 // pred_region
        %p381 = scmp.lt.s32.totalorder %s19, 1
        %s382 = scalar_select %p381, %s19, 1
        %s383 = smul.addr %s382, 8
        %s384 = smul.addr %s383, 8
        %s385 = scalar_lea.vmem %s0, %s384
      $region68: #{resst_forward.1} parent=63 // pred_fallthru
        _
    $region64: #{resst_forward.1} parent=5 // pred_fallthru
      _
    %p386 = scmp.le.s32.totalorder 1, %s19
    %p387 = scmp.lt.s32.totalorder %s19, 3
    %p388 = pnand %p386, %p387
    %p389 = pneg %p388
    // Predicated region
    $region69: #{resst_forward.1} parent=5 // pred_check
      _
    $region70: #{resst_forward.1} parent=5 // pred_check_branch
      %391 = sbr.rel (%p388) target = $region72
    $region71: #{resst_forward.1} parent=5 // pred_region
      %s392 = ssub.s32 %s19, 1
      %p393 = scmp.lt.s32.totalorder %s24, 1
      %s394 = scalar_select %p393, %s24, 1
      %s395 = smul.addr %s394, 8
      %s396 = smul.addr %s395, 8
      %s397 = scalar_lea.vmem %s0, %s396
      %p398 = pneg %p45
      %p399 = pneg %p42
      %p400 = pneg %p66
      %p401 = pneg %p63
      %p402 = pneg %p87
      %p403 = pneg %p84
      %p404 = pneg %p108
      %p405 = pneg %p105
      %p406 = pneg %p129
      %p407 = pneg %p126
      %p408 = pneg %p150
      %p409 = pneg %p147
      %p410 = pneg %p171
      %p411 = pneg %p168
      %p412 = pneg %p192
      %p413 = pneg %p189
      %p414 = pneg %p213
      %p415 = pneg %p210
      %p416 = pneg %p234
      %p417 = pneg %p231
      %p418 = pneg %p255
      %p419 = pneg %p252
      %p420 = pneg %p276
      %p421 = pneg %p273
      %p422 = pneg %p297
      %p423 = pneg %p294
      %p424 = pneg %p323
      %p425 = pneg %p320
      %p426 = scmp.lt.s32.totalorder %s24, 1
      %s427 = scalar_select %p426, %s24, 1
      %s428 = smul.addr %s427, 8
      %s429 = smul.addr %s428, 8
      %s430 = scalar_lea.vmem %s13, %s429
      %p431 = scmp.lt.s32.totalorder %s24, 1
      %s432 = scalar_select %p431, %s24, 1
      %s433 = smul.addr %s432, 8
      %s434 = smul.addr %s433, 8
      %s435 = scalar_lea.vmem %s0, %s434
      %p436 = scmp.lt.s32.totalorder %s24, 1
      %s437 = scalar_select %p436, %s24, 1
      %s438 = smul.addr %s437, 8
      %s439 = smul.addr %s438, 8
      %s440 = scalar_lea.vmem %s13, %s439
      %v442 = vld [vmem:[%s435] sm:$0xff]
      %v443 = vld [vmem:[%s435 + $0x8] sm:$0xff]
      %v444 = vld [vmem:[%s435 + $0x10] sm:$0xff]
      %v445 = vld [vmem:[%s435 + $0x18] sm:$0xff]
      %v446 = vld [vmem:[%s435 + $0x20] sm:$0xff]
      %v447 = vld [vmem:[%s435 + $0x28] sm:$0xff]
      %v448 = vld [vmem:[%s435 + $0x30] sm:$0xff]
      %v449 = vld [vmem:[%s435 + $0x38] sm:$0xff]
      %v450 = vld [vmem:[%s1] sm:$0xf]
      %v451 = vld [vmem:[%s1 + $0x4] sm:$0xf]
      %v452 = vld [vmem:[%s1 + $0x8] sm:$0xf]
      %v453 = vld [vmem:[%s1 + $0xc] sm:$0xf]
      %v454 = vpack.c.bf16 %v444, %v442
      %v455 = vpack.c.bf16 %v445, %v443
      %v456 = vpack.c.bf16 %v448, %v446
      %v457 = vpack.c.bf16 %v449, %v447
      %v458 = vld [vmem:[%s2] sm:$0xff]
      %v459 = vld [vmem:[%s2 + $0x8] sm:$0xff]
      %v460 = vld [vmem:[%s2 + $0x10] sm:$0xff]
      %v461 = vld [vmem:[%s2 + $0x18] sm:$0xff]
      %463 = vset.pattern.permute.xlu0 0
      %464 = vperm.xlu0 %463, %v458
      %v465 = vpop.permute.xlu0 %464
      %468 = vset.pattern.permute.xlu0 0
      %469 = vperm.xlu0 %468, %v459
      %v470 = vpop.permute.xlu0 %469
      %473 = vset.pattern.permute.xlu0 0
      %474 = vperm.xlu0 %473, %v460
      %v475 = vpop.permute.xlu0 %474
      %478 = vset.pattern.permute.xlu0 0
      %479 = vperm.xlu0 %478, %v461
      %v480 = vpop.permute.xlu0 %479
      %v486 = vunpack.c.l.b16 %v450
      %v487 = vunpack.c.l.b16 %v451
      %v488 = vunpack.c.l.b16 %v452
      %v489 = vunpack.c.l.b16 %v453
      %v490 = vpack.c.b16 %v487, %v486
      %v491 = vpack.c.b16 %v489, %v488
      %vm492 = vcmask 261120
      %v494 = vsel %vm492, %v490, 0
      %v497 = vsel %vm492, %v491, 0
      %499 = vmatprep.subr.bf16.mxu0 0
      %500 = vmatpush1.bf16.msra.mxu0 0
      %501 = vmatprep.subr.bf16.mxu0 0
      %502 = vmatpush1.bf16.msra.mxu0 0
      %503 = vmatprep.subr.bf16.mxu0 0
      %504 = vmatpush1.bf16.msra.mxu0 0
      %505 = vmatprep.subr.bf16.mxu0 0
      %506 = vmatpush1.bf16.msra.mxu0 0
      %507 = vmatprep.subr.bf16.mxu0 0
      %508 = vmatpush1.bf16.msra.mxu0 0
      %509 = vmatprep.subr.bf16.mxu0 0
      %510 = vmatpush1.bf16.msra.mxu0 0
      %511 = vmatprep.subr.bf16.mxu0 %v457
      %512 = vmatpush1.bf16.msra.mxu0 %v456
      %513 = vmatprep.subr.bf16.mxu0 %v455
      %514 = vmatpush1.bf16.msra.mxu0 %v454
      %515 = vmatprep.subr.bf16.mxu0 0
      %516 = vmatpush2.bf16.msra.mxu0 0
      %517 = vmatprep.subr.bf16.mxu0 0
      %518 = vmatpush2.bf16.msra.mxu0 0
      %519 = vmatprep.subr.bf16.mxu0 0
      %520 = vmatpush2.bf16.msra.mxu0 0
      %521 = vmatprep.subr.bf16.mxu0 0
      %522 = vmatpush2.bf16.msra.mxu0 0
      %523 = vmatprep.subr.bf16.mxu0 0
      %524 = vmatpush2.bf16.msra.mxu0 0
      %525 = vmatprep.subr.bf16.mxu0 0
      %526 = vmatpush2.bf16.msra.mxu0 0
      %527 = vmatprep.subr.bf16.mxu0 0
      %528 = vmatpush2.bf16.msra.mxu0 0
      %529 = vmatprep.subr.bf16.mxu0 0
      %530 = vmatpush2.bf16.msra.mxu0 0
      %531 = vmatprep.mubr.bf16.mxu0 0
      %532 = vmatmul.mubr.bf16.gmra.mxu0 %v494
      %v533 = vpop.f32.mrf.mxu0
      %v534 = vadd.f32 %v465, %v533
      %v535 = vpop.f32.mrf.mxu0
      %v536 = vadd.f32 %v465, %v535
      %v537 = vpop.f32.mrf.mxu0
      %v538 = vadd.f32 %v470, %v537
      %v539 = vpop.f32.mrf.mxu0
      %v540 = vadd.f32 %v470, %v539
      %541 = vmatprep.mubr.bf16.mxu0 0
      %542 = vmatmul.mubr.bf16.gmra.mxu0 %v497
      %v543 = vpop.f32.mrf.mxu0
      %v544 = vadd.f32 %v475, %v543
      %v545 = vpop.f32.mrf.mxu0
      %v546 = vadd.f32 %v475, %v545
      %v547 = vpop.f32.mrf.mxu0
      %v548 = vadd.f32 %v480, %v547
      %v549 = vpop.f32.mrf.mxu0
      %v550 = vadd.f32 %v480, %v549
      %551 = vdwg.mxu0
      %v552 = vlaneseq
      %v553 = vshrl.u32 %v552, 7
      %v554 = vadd.s32 %v553, 8
      %v555 = vadd.s32 %v553, 16
      %v556 = vadd.s32 %v553, 24
      %v557 = vlaneseq
      %v558 = vand.u32 %v557, 127
      %vm559 = vcmp.ge.s32.totalorder %v553, 4
      %vm560 = vcmp.ge.s32.totalorder %v554, 4
      %vm561 = vcmp.ge.s32.totalorder %v555, 4
      %vm562 = vcmp.ge.s32.totalorder %v556, 4
      %v563 = vsel %vm559, 1, 0
      %v564 = vsel %vm560, 1, 0
      %v565 = vsel %vm561, 1, 0
      %v566 = vsel %vm562, 1, 0
      %vm567 = vcmp.ge.s32.totalorder %v558, 4
      %v568 = vsel %vm567, 1, 0
      %vm569 = vcmp.ge.s32.totalorder %v553, 8
      %vm570 = vcmp.ge.s32.totalorder %v554, 8
      %vm571 = vcmp.ge.s32.totalorder %v555, 8
      %vm572 = vcmp.ge.s32.totalorder %v556, 8
      %v573 = vsel %vm569, 1, 0
      %v574 = vsel %vm570, 1, 0
      %v575 = vsel %vm571, 1, 0
      %v576 = vsel %vm572, 1, 0
      %v577 = vadd.s32 %v563, %v573
      %v578 = vadd.s32 %v564, %v574
      %v579 = vadd.s32 %v565, %v575
      %v580 = vadd.s32 %v566, %v576
      %vm581 = vcmp.ge.s32.totalorder %v558, 8
      %v582 = vsel %vm581, 1, 0
      %v583 = vadd.s32 %v568, %v582
      %vm584 = vcmp.ge.s32.totalorder %v553, 12
      %vm585 = vcmp.ge.s32.totalorder %v554, 12
      %vm586 = vcmp.ge.s32.totalorder %v555, 12
      %vm587 = vcmp.ge.s32.totalorder %v556, 12
      %v588 = vsel %vm584, 1, 0
      %v589 = vsel %vm585, 1, 0
      %v590 = vsel %vm586, 1, 0
      %v591 = vsel %vm587, 1, 0
      %v592 = vadd.s32 %v577, %v588
      %v593 = vadd.s32 %v578, %v589
      %v594 = vadd.s32 %v579, %v590
      %v595 = vadd.s32 %v580, %v591
      %vm596 = vcmp.ge.s32.totalorder %v558, 12
      %v597 = vsel %vm596, 1, 0
      %v598 = vadd.s32 %v583, %v597
      %vm599 = vcmp.ge.s32.totalorder %v553, 16
      %vm600 = vcmp.ge.s32.totalorder %v554, 16
      %vm601 = vcmp.ge.s32.totalorder %v555, 16
      %vm602 = vcmp.ge.s32.totalorder %v556, 16
      %v603 = vsel %vm599, 1, 0
      %v604 = vsel %vm600, 1, 0
      %v605 = vsel %vm601, 1, 0
      %v606 = vsel %vm602, 1, 0
      %v607 = vadd.s32 %v592, %v603
      %v608 = vadd.s32 %v593, %v604
      %v609 = vadd.s32 %v594, %v605
      %v610 = vadd.s32 %v595, %v606
      %vm611 = vcmp.ge.s32.totalorder %v558, 16
      %v612 = vsel %vm611, 1, 0
      %v613 = vadd.s32 %v598, %v612
      %vm614 = vcmp.ge.s32.totalorder %v553, 20
      %vm615 = vcmp.ge.s32.totalorder %v554, 20
      %vm616 = vcmp.ge.s32.totalorder %v555, 20
      %vm617 = vcmp.ge.s32.totalorder %v556, 20
      %v618 = vsel %vm614, 1, 0
      %v619 = vsel %vm615, 1, 0
      %v620 = vsel %vm616, 1, 0
      %v621 = vsel %vm617, 1, 0
      %v622 = vadd.s32 %v607, %v618
      %v623 = vadd.s32 %v608, %v619
      %v624 = vadd.s32 %v609, %v620
      %v625 = vadd.s32 %v610, %v621
      %vm626 = vcmp.ge.s32.totalorder %v558, 20
      %v627 = vsel %vm626, 1, 0
      %v628 = vadd.s32 %v613, %v627
      %vm629 = vcmp.ge.s32.totalorder %v553, 24
      %vm630 = vcmp.ge.s32.totalorder %v554, 24
      %vm631 = vcmp.ge.s32.totalorder %v555, 24
      %vm632 = vcmp.ge.s32.totalorder %v556, 24
      %v633 = vsel %vm629, 1, 0
      %v634 = vsel %vm630, 1, 0
      %v635 = vsel %vm631, 1, 0
      %v636 = vsel %vm632, 1, 0
      %v637 = vadd.s32 %v622, %v633
      %v638 = vadd.s32 %v623, %v634
      %v639 = vadd.s32 %v624, %v635
      %v640 = vadd.s32 %v625, %v636
      %vm641 = vcmp.ge.s32.totalorder %v558, 24
      %v642 = vsel %vm641, 1, 0
      %v643 = vadd.s32 %v628, %v642
      %vm644 = vcmp.ge.s32.totalorder %v553, 28
      %vm645 = vcmp.ge.s32.totalorder %v554, 28
      %vm646 = vcmp.ge.s32.totalorder %v555, 28
      %vm647 = vcmp.ge.s32.totalorder %v556, 28
      %v648 = vsel %vm644, 1, 0
      %v649 = vsel %vm645, 1, 0
      %v650 = vsel %vm646, 1, 0
      %v651 = vsel %vm647, 1, 0
      %v652 = vadd.s32 %v637, %v648
      %v653 = vadd.s32 %v638, %v649
      %v654 = vadd.s32 %v639, %v650
      %v655 = vadd.s32 %v640, %v651
      %vm656 = vcmp.ge.s32.totalorder %v558, 28
      %v657 = vsel %vm656, 1, 0
      %v658 = vadd.s32 %v643, %v657
      %vm659 = vcmp.eq.s32.totalorder %v652, %v658
      %vm660 = vcmp.eq.s32.totalorder %v653, %v658
      %vm661 = vcmp.eq.s32.totalorder %v654, %v658
      %vm662 = vcmp.eq.s32.totalorder %v655, %v658
      %v663 = vsel %vm659, 1, 0
      %v664 = vsel %vm660, 1, 0
      %v665 = vsel %vm661, 1, 0
      %v666 = vsel %vm662, 1, 0
      %v667 = vcvt.s32.f32 %v663
      %v668 = vcvt.s32.f32 %v664
      %v669 = vcvt.s32.f32 %v665
      %v670 = vcvt.s32.f32 %v666
      %v671 = vld [vmem:[%s10] sm:$0xf]
      %v672 = vld [vmem:[%s10 + $0x4] sm:$0xf]
      %v673 = vld [vmem:[%s10 + $0x8] sm:$0xf]
      %v674 = vld [vmem:[%s10 + $0xc] sm:$0xf]
      %v675 = vld [vmem:[%s10 + $0x10] sm:$0xf]
      %v676 = vld [vmem:[%s10 + $0x14] sm:$0xf]
      %v677 = vld [vmem:[%s10 + $0x18] sm:$0xf]
      %v678 = vld [vmem:[%s10 + $0x1c] sm:$0xf]
      %v679 = vld [vmem:[%s10 + $0x20] sm:$0xf]
      %v680 = vld [vmem:[%s10 + $0x24] sm:$0xf]
      %v681 = vld [vmem:[%s10 + $0x28] sm:$0xf]
      %v682 = vld [vmem:[%s10 + $0x2c] sm:$0xf]
      %v683 = vpack.c.bf16 %v538, %v534
      %v684 = vpack.c.bf16 %v540, %v536
      %v685 = vpack.c.bf16 %v548, %v544
      %v686 = vpack.c.bf16 %v550, %v546
      %v699 = vunpack.c.l.b16 %v671
      %v700 = vunpack.c.l.b16 %v672
      %v701 = vunpack.c.l.b16 %v673
      %v702 = vunpack.c.l.b16 %v674
      %v703 = vunpack.c.l.b16 %v675
      %v704 = vunpack.c.l.b16 %v676
      %v705 = vunpack.c.l.b16 %v677
      %v706 = vunpack.c.l.b16 %v678
      %v707 = vunpack.c.l.b16 %v679
      %v708 = vunpack.c.l.b16 %v680
      %v709 = vunpack.c.l.b16 %v681
      %v710 = vunpack.c.l.b16 %v682
      %v711 = vpack.c.b16 %v700, %v699
      %v712 = vpack.c.b16 %v702, %v701
      %v713 = vpack.c.b16 %v704, %v703
      %v714 = vpack.c.b16 %v706, %v705
      %v715 = vpack.c.b16 %v708, %v707
      %v716 = vpack.c.b16 %v710, %v709
      %v718 = vsel %vm492, %v711, 0
      %v721 = vsel %vm492, %v712, 0
      %v724 = vsel %vm492, %v713, 0
      %v727 = vsel %vm492, %v714, 0
      %v730 = vsel %vm492, %v715, 0
      %v733 = vsel %vm492, %v716, 0
      %735 = vmatprep.subr.bf16.mxu0 0
      %736 = vmatpush1.bf16.msra.mxu0 0
      %737 = vmatprep.subr.bf16.mxu0 0
      %738 = vmatpush1.bf16.msra.mxu0 0
      %739 = vmatprep.subr.bf16.mxu0 0
      %740 = vmatpush1.bf16.msra.mxu0 0
      %741 = vmatprep.subr.bf16.mxu0 0
      %742 = vmatpush1.bf16.msra.mxu0 0
      %743 = vmatprep.subr.bf16.mxu0 0
      %744 = vmatpush1.bf16.msra.mxu0 0
      %745 = vmatprep.subr.bf16.mxu0 0
      %746 = vmatpush1.bf16.msra.mxu0 0
      %747 = vmatprep.subr.bf16.mxu0 %v686
      %748 = vmatpush1.bf16.msra.mxu0 %v685
      %749 = vmatprep.subr.bf16.mxu0 %v684
      %750 = vmatpush1.bf16.msra.mxu0 %v683
      %751 = vmatprep.subr.bf16.mxu0 0
      %752 = vmatpush2.bf16.msra.mxu0 0
      %753 = vmatprep.subr.bf16.mxu0 0
      %754 = vmatpush2.bf16.msra.mxu0 0
      %755 = vmatprep.subr.bf16.mxu0 0
      %756 = vmatpush2.bf16.msra.mxu0 0
      %757 = vmatprep.subr.bf16.mxu0 0
      %758 = vmatpush2.bf16.msra.mxu0 0
      %759 = vmatprep.subr.bf16.mxu0 0
      %760 = vmatpush2.bf16.msra.mxu0 0
      %761 = vmatprep.subr.bf16.mxu0 0
      %762 = vmatpush2.bf16.msra.mxu0 0
      %763 = vmatprep.subr.bf16.mxu0 0
      %764 = vmatpush2.bf16.msra.mxu0 0
      %765 = vmatprep.subr.bf16.mxu0 0
      %766 = vmatpush2.bf16.msra.mxu0 0
      %767 = vmatprep.mubr.bf16.mxu0 0
      %768 = vmatmul.mubr.bf16.gmra.mxu0 %v718
      %v769 = vpop.f32.mrf.mxu0
      %v770 = vadd.f32 0.0, %v769
      %v771 = vpop.f32.mrf.mxu0
      %v772 = vadd.f32 0.0, %v771
      %v773 = vpop.f32.mrf.mxu0
      %v774 = vadd.f32 0.0, %v773
      %v775 = vpop.f32.mrf.mxu0
      %v776 = vadd.f32 0.0, %v775
      %777 = vmatprep.mubr.bf16.mxu0 0
      %778 = vmatmul.mubr.bf16.gmra.mxu0 %v721
      %v779 = vpop.f32.mrf.mxu0
      %v780 = vadd.f32 0.0, %v779
      %v781 = vpop.f32.mrf.mxu0
      %v782 = vadd.f32 0.0, %v781
      %v783 = vpop.f32.mrf.mxu0
      %v784 = vadd.f32 0.0, %v783
      %v785 = vpop.f32.mrf.mxu0
      %v786 = vadd.f32 0.0, %v785
      %787 = vmatprep.mubr.bf16.mxu0 0
      %788 = vmatmul.mubr.bf16.gmra.mxu0 %v724
      %v789 = vpop.f32.mrf.mxu0
      %v790 = vadd.f32 0.0, %v789
      %v791 = vpop.f32.mrf.mxu0
      %v792 = vadd.f32 0.0, %v791
      %v793 = vpop.f32.mrf.mxu0
      %v794 = vadd.f32 0.0, %v793
      %v795 = vpop.f32.mrf.mxu0
      %v796 = vadd.f32 0.0, %v795
      %797 = vmatprep.mubr.bf16.mxu0 0
      %798 = vmatmul.mubr.bf16.gmra.mxu0 %v727
      %v799 = vpop.f32.mrf.mxu0
      %v800 = vadd.f32 0.0, %v799
      %v801 = vpop.f32.mrf.mxu0
      %v802 = vadd.f32 0.0, %v801
      %v803 = vpop.f32.mrf.mxu0
      %v804 = vadd.f32 0.0, %v803
      %v805 = vpop.f32.mrf.mxu0
      %v806 = vadd.f32 0.0, %v805
      %807 = vmatprep.mubr.bf16.mxu0 0
      %808 = vmatmul.mubr.bf16.gmra.mxu0 %v730
      %v809 = vpop.f32.mrf.mxu0
      %v810 = vadd.f32 0.0, %v809
      %v811 = vpop.f32.mrf.mxu0
      %v812 = vadd.f32 0.0, %v811
      %v813 = vpop.f32.mrf.mxu0
      %v814 = vadd.f32 0.0, %v813
      %v815 = vpop.f32.mrf.mxu0
      %v816 = vadd.f32 0.0, %v815
      %817 = vmatprep.mubr.bf16.mxu0 0
      %818 = vmatmul.mubr.bf16.gmra.mxu0 %v733
      %v819 = vpop.f32.mrf.mxu0
      %v820 = vadd.f32 0.0, %v819
      %v821 = vpop.f32.mrf.mxu0
      %v822 = vadd.f32 0.0, %v821
      %v823 = vpop.f32.mrf.mxu0
      %v824 = vadd.f32 0.0, %v823
      %v825 = vpop.f32.mrf.mxu0
      %v826 = vadd.f32 0.0, %v825
      %827 = vdwg.mxu0
      %v828 = vmul.f32 %v770, %v770
      %v829 = vmul.f32 %v772, %v772
      %v830 = vmul.f32 %v774, %v774
      %v831 = vmul.f32 %v776, %v776
      %v832 = vmul.f32 %v780, %v780
      %v833 = vmul.f32 %v782, %v782
      %v834 = vmul.f32 %v784, %v784
      %v835 = vmul.f32 %v786, %v786
      %v836 = vpack.c.bf16 %v668, %v667
      %v837 = vpack.c.bf16 %v670, %v669
      %v838 = vpack.c.bf16 %v830, %v828
      %v839 = vpack.c.bf16 %v831, %v829
      %v840 = vpack.c.bf16 %v834, %v832
      %v841 = vpack.c.bf16 %v835, %v833
      %v843 = vsel %vm492, %v836, 0
      %v846 = vsel %vm492, %v837, 0
      %848 = vmatprep.subr.bf16.mxu0 0
      %849 = vmatpush1.bf16.msra.mxu0 0
      %850 = vmatprep.subr.bf16.mxu0 0
      %851 = vmatpush1.bf16.msra.mxu0 0
      %852 = vmatprep.subr.bf16.mxu0 0
      %853 = vmatpush1.bf16.msra.mxu0 0
      %854 = vmatprep.subr.bf16.mxu0 0
      %855 = vmatpush1.bf16.msra.mxu0 0
      %856 = vmatprep.subr.bf16.mxu0 0
      %857 = vmatpush1.bf16.msra.mxu0 0
      %858 = vmatprep.subr.bf16.mxu0 0
      %859 = vmatpush1.bf16.msra.mxu0 0
      %860 = vmatprep.subr.bf16.mxu0 %v841
      %861 = vmatpush1.bf16.msra.mxu0 %v840
      %862 = vmatprep.subr.bf16.mxu0 %v839
      %863 = vmatpush1.bf16.msra.mxu0 %v838
      %864 = vmatprep.subr.bf16.mxu0 0
      %865 = vmatpush2.bf16.msra.mxu0 0
      %866 = vmatprep.subr.bf16.mxu0 0
      %867 = vmatpush2.bf16.msra.mxu0 0
      %868 = vmatprep.subr.bf16.mxu0 0
      %869 = vmatpush2.bf16.msra.mxu0 0
      %870 = vmatprep.subr.bf16.mxu0 0
      %871 = vmatpush2.bf16.msra.mxu0 0
      %872 = vmatprep.subr.bf16.mxu0 0
      %873 = vmatpush2.bf16.msra.mxu0 0
      %874 = vmatprep.subr.bf16.mxu0 0
      %875 = vmatpush2.bf16.msra.mxu0 0
      %876 = vmatprep.subr.bf16.mxu0 0
      %877 = vmatpush2.bf16.msra.mxu0 0
      %878 = vmatprep.subr.bf16.mxu0 0
      %879 = vmatpush2.bf16.msra.mxu0 0
      %880 = vmatprep.mubr.bf16.mxu0 0
      %881 = vmatmul.mubr.bf16.gmra.mxu0 %v843
      %v882 = vpop.f32.mrf.mxu0
      %v883 = vadd.f32 1e-12, %v882
      %v884 = vpop.f32.mrf.mxu0
      %v885 = vadd.f32 1e-12, %v884
      %v886 = vpop.f32.mrf.mxu0
      %v887 = vadd.f32 1e-12, %v886
      %v888 = vpop.f32.mrf.mxu0
      %v889 = vadd.f32 1e-12, %v888
      %890 = vmatprep.mubr.bf16.mxu0 0
      %891 = vmatmul.mubr.bf16.gmra.mxu0 %v846
      %v892 = vpop.f32.mrf.mxu0
      %v893 = vadd.f32 1e-12, %v892
      %v894 = vpop.f32.mrf.mxu0
      %v895 = vadd.f32 1e-12, %v894
      %v896 = vpop.f32.mrf.mxu0
      %v897 = vadd.f32 1e-12, %v896
      %v898 = vpop.f32.mrf.mxu0
      %v899 = vadd.f32 1e-12, %v898
      %900 = vdwg.mxu0
      %v901 = vrsqrt.pop %v883
      %v902 = vrsqrt.pop %v885
      %v903 = vrsqrt.pop %v887
      %v904 = vrsqrt.pop %v889
      %v905 = vrsqrt.pop %v893
      %v906 = vrsqrt.pop %v895
      %v907 = vrsqrt.pop %v897
      %v908 = vrsqrt.pop %v899
      %v909 = vmul.f32 %v770, %v901
      %v910 = vmul.f32 %v772, %v902
      %v911 = vmul.f32 %v774, %v903
      %v912 = vmul.f32 %v776, %v904
      %v913 = vmul.f32 %v780, %v905
      %v914 = vmul.f32 %v782, %v906
      %v915 = vmul.f32 %v784, %v907
      %v916 = vmul.f32 %v786, %v908
      %v917 = vmul.f32 %v790, %v790
      %v918 = vmul.f32 %v792, %v792
      %v919 = vmul.f32 %v794, %v794
      %v920 = vmul.f32 %v796, %v796
      %v921 = vmul.f32 %v800, %v800
      %v922 = vmul.f32 %v802, %v802
      %v923 = vmul.f32 %v804, %v804
      %v924 = vmul.f32 %v806, %v806
      %v925 = vpack.c.bf16 %v919, %v917
      %v926 = vpack.c.bf16 %v920, %v918
      %v927 = vpack.c.bf16 %v923, %v921
      %v928 = vpack.c.bf16 %v924, %v922
      %929 = vmatprep.subr.bf16.mxu0 0
      %930 = vmatpush1.bf16.msra.mxu0 0
      %931 = vmatprep.subr.bf16.mxu0 0
      %932 = vmatpush1.bf16.msra.mxu0 0
      %933 = vmatprep.subr.bf16.mxu0 0
      %934 = vmatpush1.bf16.msra.mxu0 0
      %935 = vmatprep.subr.bf16.mxu0 0
      %936 = vmatpush1.bf16.msra.mxu0 0
      %937 = vmatprep.subr.bf16.mxu0 0
      %938 = vmatpush1.bf16.msra.mxu0 0
      %939 = vmatprep.subr.bf16.mxu0 0
      %940 = vmatpush1.bf16.msra.mxu0 0
      %941 = vmatprep.subr.bf16.mxu0 %v928
      %942 = vmatpush1.bf16.msra.mxu0 %v927
      %943 = vmatprep.subr.bf16.mxu0 %v926
      %944 = vmatpush1.bf16.msra.mxu0 %v925
      %945 = vmatprep.subr.bf16.mxu0 0
      %946 = vmatpush2.bf16.msra.mxu0 0
      %947 = vmatprep.subr.bf16.mxu0 0
      %948 = vmatpush2.bf16.msra.mxu0 0
      %949 = vmatprep.subr.bf16.mxu0 0
      %950 = vmatpush2.bf16.msra.mxu0 0
      %951 = vmatprep.subr.bf16.mxu0 0
      %952 = vmatpush2.bf16.msra.mxu0 0
      %953 = vmatprep.subr.bf16.mxu0 0
      %954 = vmatpush2.bf16.msra.mxu0 0
      %955 = vmatprep.subr.bf16.mxu0 0
      %956 = vmatpush2.bf16.msra.mxu0 0
      %957 = vmatprep.subr.bf16.mxu0 0
      %958 = vmatpush2.bf16.msra.mxu0 0
      %959 = vmatprep.subr.bf16.mxu0 0
      %960 = vmatpush2.bf16.msra.mxu0 0
      %961 = vmatprep.mubr.bf16.mxu0 0
      %962 = vmatmul.mubr.bf16.gmra.mxu0 %v843
      %v963 = vpop.f32.mrf.mxu0
      %v964 = vadd.f32 1e-12, %v963
      %v965 = vpop.f32.mrf.mxu0
      %v966 = vadd.f32 1e-12, %v965
      %v967 = vpop.f32.mrf.mxu0
      %v968 = vadd.f32 1e-12, %v967
      %v969 = vpop.f32.mrf.mxu0
      %v970 = vadd.f32 1e-12, %v969
      %971 = vmatprep.mubr.bf16.mxu0 0
      %972 = vmatmul.mubr.bf16.gmra.mxu0 %v846
      %v973 = vpop.f32.mrf.mxu0
      %v974 = vadd.f32 1e-12, %v973
      %v975 = vpop.f32.mrf.mxu0
      %v976 = vadd.f32 1e-12, %v975
      %v977 = vpop.f32.mrf.mxu0
      %v978 = vadd.f32 1e-12, %v977
      %v979 = vpop.f32.mrf.mxu0
      %v980 = vadd.f32 1e-12, %v979
      %981 = vdwg.mxu0
      %v982 = vrsqrt.pop %v964
      %v983 = vrsqrt.pop %v966
      %v984 = vrsqrt.pop %v968
      %v985 = vrsqrt.pop %v970
      %v986 = vrsqrt.pop %v974
      %v987 = vrsqrt.pop %v976
      %v988 = vrsqrt.pop %v978
      %v989 = vrsqrt.pop %v980
      %v990 = vmul.f32 %v790, %v982
      %v991 = vmul.f32 %v792, %v983
      %v992 = vmul.f32 %v794, %v984
      %v993 = vmul.f32 %v796, %v985
      %v994 = vmul.f32 %v800, %v986
      %v995 = vmul.f32 %v802, %v987
      %v996 = vmul.f32 %v804, %v988
      %v997 = vmul.f32 %v806, %v989
      %v998 = vpack.c.bf16 %v814, %v810
      %v999 = vpack.c.bf16 %v816, %v812
      %v1000 = vpack.c.bf16 %v824, %v820
      %v1001 = vpack.c.bf16 %v826, %v822
      %v1002 = vpack.c.bf16 %v992, %v990
      %v1003 = vpack.c.bf16 %v993, %v991
      %v1004 = vpack.c.bf16 %v996, %v994
      %v1005 = vpack.c.bf16 %v997, %v995
      %1006 = vmatprep.subr.bf16.mxu0 0
      %1007 = vmatpush1.bf16.xpose.msra.mxu0 0
      %1008 = vmatprep.subr.bf16.mxu0 0
      %1009 = vmatpush1.bf16.xpose.msra.mxu0 0
      %1010 = vmatprep.subr.bf16.mxu0 0
      %1011 = vmatpush1.bf16.xpose.msra.mxu0 0
      %1012 = vmatprep.subr.bf16.mxu0 0
      %1013 = vmatpush1.bf16.xpose.msra.mxu0 0
      %1014 = vmatprep.subr.bf16.mxu0 0
      %1015 = vmatpush1.bf16.xpose.msra.mxu0 0
      %1016 = vmatprep.subr.bf16.mxu0 0
      %1017 = vmatpush1.bf16.xpose.msra.mxu0 0
      %1018 = vmatprep.subr.bf16.mxu0 %v1005
      %1019 = vmatpush1.bf16.xpose.msra.mxu0 %v1004
      %1020 = vmatprep.subr.bf16.mxu0 %v1003
      %1021 = vmatpush1.bf16.xpose.msra.mxu0 %v1002
      %1022 = vmatprep.subr.bf16.mxu0 0
      %1023 = vmatpush2.bf16.xpose.msra.mxu0 0
      %1024 = vmatprep.subr.bf16.mxu0 0
      %1025 = vmatpush2.bf16.xpose.msra.mxu0 0
      %1026 = vmatprep.subr.bf16.mxu0 0
      %1027 = vmatpush2.bf16.xpose.msra.mxu0 0
      %1028 = vmatprep.subr.bf16.mxu0 0
      %1029 = vmatpush2.bf16.xpose.msra.mxu0 0
      %1030 = vmatprep.subr.bf16.mxu0 0
      %1031 = vmatpush2.bf16.xpose.msra.mxu0 0
      %1032 = vmatprep.subr.bf16.mxu0 0
      %1033 = vmatpush2.bf16.xpose.msra.mxu0 0
      %1034 = vmatprep.subr.bf16.mxu0 0
      %1035 = vmatpush2.bf16.xpose.msra.mxu0 0
      %1036 = vmatprep.subr.bf16.mxu0 0
      %1037 = vmatpush2.bf16.xpose.msra.mxu0 0
      %1038 = vmatprep.mubr.bf16.mxu0 %v999
      %1039 = vmatmul.mubr.bf16.gmra.mxu0 %v998
      %v1040 = vpop.f32.mrf.mxu0
      %v1041 = vadd.f32 0.0, %v1040
      %v1042 = vpop.f32.mrf.mxu0
      %v1043 = vpop.f32.mrf.mxu0
      %v1044 = vadd.f32 0.0, %v1043
      %v1045 = vpop.f32.mrf.mxu0
      %1046 = vmatprep.mubr.bf16.mxu0 %v1001
      %1047 = vmatmul.mubr.bf16.gmra.mxu0 %v1000
      %v1048 = vpop.f32.mrf.mxu0
      %v1049 = vadd.f32 0.0, %v1048
      %v1050 = vpop.f32.mrf.mxu0
      %v1051 = vpop.f32.mrf.mxu0
      %v1052 = vadd.f32 0.0, %v1051
      %v1053 = vpop.f32.mrf.mxu0
      %1054 = vdwg.mxu0
      %v1055 = vmul.f32 %v1041, %v667
      %v1056 = vmul.f32 %v1044, %v668
      %v1057 = vmul.f32 %v1049, %v669
      %v1058 = vmul.f32 %v1052, %v670
      %v1059 = vmul.f32 %v810, 0.5
      %v1060 = vmul.f32 %v812, 0.5
      %v1061 = vmul.f32 %v814, 0.5
      %v1062 = vmul.f32 %v816, 0.5
      %v1063 = vmul.f32 %v820, 0.5
      %v1064 = vmul.f32 %v822, 0.5
      %v1065 = vmul.f32 %v824, 0.5
      %v1066 = vmul.f32 %v826, 0.5
      %v1067 = vpack.c.bf16 %v1056, %v1055
      %v1068 = vpack.c.bf16 %v1058, %v1057
      %v1069 = vpack.c.bf16 %v911, %v909
      %v1070 = vpack.c.bf16 %v912, %v910
      %v1071 = vpack.c.bf16 %v915, %v913
      %v1072 = vpack.c.bf16 %v916, %v914
      %v1074 = vsel %vm492, %v1067, 0
      %v1077 = vsel %vm492, %v1068, 0
      %1079 = vmatprep.subr.bf16.mxu0 0
      %1080 = vmatpush1.bf16.msra.mxu0 0
      %1081 = vmatprep.subr.bf16.mxu0 0
      %1082 = vmatpush1.bf16.msra.mxu0 0
      %1083 = vmatprep.subr.bf16.mxu0 0
      %1084 = vmatpush1.bf16.msra.mxu0 0
      %1085 = vmatprep.subr.bf16.mxu0 0
      %1086 = vmatpush1.bf16.msra.mxu0 0
      %1087 = vmatprep.subr.bf16.mxu0 0
      %1088 = vmatpush1.bf16.msra.mxu0 0
      %1089 = vmatprep.subr.bf16.mxu0 0
      %1090 = vmatpush1.bf16.msra.mxu0 0
      %1091 = vmatprep.subr.bf16.mxu0 %v1072
      %1092 = vmatpush1.bf16.msra.mxu0 %v1071
      %1093 = vmatprep.subr.bf16.mxu0 %v1070
      %1094 = vmatpush1.bf16.msra.mxu0 %v1069
      %1095 = vmatprep.subr.bf16.mxu0 0
      %1096 = vmatpush2.bf16.msra.mxu0 0
      %1097 = vmatprep.subr.bf16.mxu0 0
      %1098 = vmatpush2.bf16.msra.mxu0 0
      %1099 = vmatprep.subr.bf16.mxu0 0
      %1100 = vmatpush2.bf16.msra.mxu0 0
      %1101 = vmatprep.subr.bf16.mxu0 0
      %1102 = vmatpush2.bf16.msra.mxu0 0
      %1103 = vmatprep.subr.bf16.mxu0 0
      %1104 = vmatpush2.bf16.msra.mxu0 0
      %1105 = vmatprep.subr.bf16.mxu0 0
      %1106 = vmatpush2.bf16.msra.mxu0 0
      %1107 = vmatprep.subr.bf16.mxu0 0
      %1108 = vmatpush2.bf16.msra.mxu0 0
      %1109 = vmatprep.subr.bf16.mxu0 0
      %1110 = vmatpush2.bf16.msra.mxu0 0
      %1111 = vmatprep.mubr.bf16.mxu0 0
      %1112 = vmatmul.mubr.bf16.gmra.mxu0 %v1074
      %v1113 = vpop.f32.mrf.mxu0
      %v1114 = vadd.f32 0.0, %v1113
      %v1115 = vpop.f32.mrf.mxu0
      %v1116 = vadd.f32 0.0, %v1115
      %v1117 = vpop.f32.mrf.mxu0
      %v1118 = vadd.f32 0.0, %v1117
      %v1119 = vpop.f32.mrf.mxu0
      %v1120 = vadd.f32 0.0, %v1119
      %1121 = vmatprep.mubr.bf16.mxu0 0
      %1122 = vmatmul.mubr.bf16.gmra.mxu0 %v1077
      %v1123 = vpop.f32.mrf.mxu0
      %v1124 = vadd.f32 0.0, %v1123
      %v1125 = vpop.f32.mrf.mxu0
      %v1126 = vadd.f32 0.0, %v1125
      %v1127 = vpop.f32.mrf.mxu0
      %v1128 = vadd.f32 0.0, %v1127
      %v1129 = vpop.f32.mrf.mxu0
      %v1130 = vadd.f32 0.0, %v1129
      %1131 = vdwg.mxu0
      %v1132 = vmul.f32 %v1114, 0.31830987
      %v1133 = vmul.f32 %v1116, 0.31830987
      %v1134 = vmul.f32 %v1118, 0.31830987
      %v1135 = vmul.f32 %v1120, 0.31830987
      %v1136 = vmul.f32 %v1124, 0.31830987
      %v1137 = vmul.f32 %v1126, 0.31830987
      %v1138 = vmul.f32 %v1128, 0.31830987
      %v1139 = vmul.f32 %v1130, 0.31830987
      %v1140 = vadd.f32 %v1059, %v1132
      %v1141 = vadd.f32 %v1060, %v1133
      %v1142 = vadd.f32 %v1061, %v1134
      %v1143 = vadd.f32 %v1062, %v1135
      %v1144 = vadd.f32 %v1063, %v1136
      %v1145 = vadd.f32 %v1064, %v1137
      %v1146 = vadd.f32 %v1065, %v1138
      %v1147 = vadd.f32 %v1066, %v1139
      %v1148 = vmul.f32 %v1140, %v1140
      %v1149 = vmul.f32 %v1141, %v1141
      %v1150 = vmul.f32 %v1142, %v1142
      %v1151 = vmul.f32 %v1143, %v1143
      %v1152 = vmul.f32 %v1144, %v1144
      %v1153 = vmul.f32 %v1145, %v1145
      %v1154 = vmul.f32 %v1146, %v1146
      %v1155 = vmul.f32 %v1147, %v1147
      %v1156 = vpack.c.bf16 %v1150, %v1148
      %v1157 = vpack.c.bf16 %v1151, %v1149
      %v1158 = vpack.c.bf16 %v1154, %v1152
      %v1159 = vpack.c.bf16 %v1155, %v1153
      %1160 = vmatprep.subr.bf16.mxu0 0
      %1161 = vmatpush1.bf16.msra.mxu0 0
      %1162 = vmatprep.subr.bf16.mxu0 0
      %1163 = vmatpush1.bf16.msra.mxu0 0
      %1164 = vmatprep.subr.bf16.mxu0 0
      %1165 = vmatpush1.bf16.msra.mxu0 0
      %1166 = vmatprep.subr.bf16.mxu0 0
      %1167 = vmatpush1.bf16.msra.mxu0 0
      %1168 = vmatprep.subr.bf16.mxu0 0
      %1169 = vmatpush1.bf16.msra.mxu0 0
      %1170 = vmatprep.subr.bf16.mxu0 0
      %1171 = vmatpush1.bf16.msra.mxu0 0
      %1172 = vmatprep.subr.bf16.mxu0 %v1159
      %1173 = vmatpush1.bf16.msra.mxu0 %v1158
      %1174 = vmatprep.subr.bf16.mxu0 %v1157
      %1175 = vmatpush1.bf16.msra.mxu0 %v1156
      %1176 = vmatprep.subr.bf16.mxu0 0
      %1177 = vmatpush2.bf16.msra.mxu0 0
      %1178 = vmatprep.subr.bf16.mxu0 0
      %1179 = vmatpush2.bf16.msra.mxu0 0
      %1180 = vmatprep.subr.bf16.mxu0 0
      %1181 = vmatpush2.bf16.msra.mxu0 0
      %1182 = vmatprep.subr.bf16.mxu0 0
      %1183 = vmatpush2.bf16.msra.mxu0 0
      %1184 = vmatprep.subr.bf16.mxu0 0
      %1185 = vmatpush2.bf16.msra.mxu0 0
      %1186 = vmatprep.subr.bf16.mxu0 0
      %1187 = vmatpush2.bf16.msra.mxu0 0
      %1188 = vmatprep.subr.bf16.mxu0 0
      %1189 = vmatpush2.bf16.msra.mxu0 0
      %1190 = vmatprep.subr.bf16.mxu0 0
      %1191 = vmatpush2.bf16.msra.mxu0 0
      %1192 = vmatprep.mubr.bf16.mxu0 0
      %1193 = vmatmul.mubr.bf16.gmra.mxu0 %v843
      %v1194 = vpop.f32.mrf.mxu0
      %v1195 = vadd.f32 1e-12, %v1194
      %v1196 = vpop.f32.mrf.mxu0
      %v1197 = vadd.f32 1e-12, %v1196
      %v1198 = vpop.f32.mrf.mxu0
      %v1199 = vadd.f32 1e-12, %v1198
      %v1200 = vpop.f32.mrf.mxu0
      %v1201 = vadd.f32 1e-12, %v1200
      %1202 = vmatprep.mubr.bf16.mxu0 0
      %1203 = vmatmul.mubr.bf16.gmra.mxu0 %v846
      %v1204 = vpop.f32.mrf.mxu0
      %v1205 = vadd.f32 1e-12, %v1204
      %v1206 = vpop.f32.mrf.mxu0
      %v1207 = vadd.f32 1e-12, %v1206
      %v1208 = vpop.f32.mrf.mxu0
      %v1209 = vadd.f32 1e-12, %v1208
      %v1210 = vpop.f32.mrf.mxu0
      %v1211 = vadd.f32 1e-12, %v1210
      %1212 = vdwg.mxu0
      %v1213 = vrsqrt.pop %v1195
      %v1214 = vrsqrt.pop %v1197
      %v1215 = vrsqrt.pop %v1199
      %v1216 = vrsqrt.pop %v1201
      %v1217 = vrsqrt.pop %v1205
      %v1218 = vrsqrt.pop %v1207
      %v1219 = vrsqrt.pop %v1209
      %v1220 = vrsqrt.pop %v1211
      %v1221 = vmul.f32 %v1140, %v1213
      %v1222 = vmul.f32 %v1141, %v1214
      %v1223 = vmul.f32 %v1142, %v1215
      %v1224 = vmul.f32 %v1143, %v1216
      %v1225 = vmul.f32 %v1144, %v1217
      %v1226 = vmul.f32 %v1145, %v1218
      %v1227 = vmul.f32 %v1146, %v1219
      %v1228 = vmul.f32 %v1147, %v1220
      %v1229 = vadd.f32 %v534, %v538
      %v1230 = vadd.f32 %v1229, %v544
      %v1231 = vadd.f32 %v1230, %v548
      %v1232 = vrot.slane %v1231, 4
      %v1233 = vadd.f32 %v1231, %v1232
      %v1234 = vrot.slane %v1233, 2
      %v1235 = vadd.f32 %v1233, %v1234
      %v1236 = vrot.slane %v1235, 1
      %v1237 = vadd.f32 %v1235, %v1236
      %v1238 = vadd.f32 %v536, %v540
      %v1239 = vadd.f32 %v1238, %v546
      %v1240 = vadd.f32 %v1239, %v550
      %v1241 = vrot.slane %v1240, 4
      %v1242 = vadd.f32 %v1240, %v1241
      %v1243 = vrot.slane %v1242, 2
      %v1244 = vadd.f32 %v1242, %v1243
      %v1245 = vrot.slane %v1244, 1
      %v1246 = vadd.f32 %v1244, %v1245
      %v1247 = vrcp.pop 32.0
      %v1248 = vmul.f32 %v1237, %v1247
      %v1249 = vmul.f32 %v1246, %v1247
      %v1250 = vsub.f32 %v534, %v1248
      %v1251 = vsub.f32 %v536, %v1249
      %v1252 = vsub.f32 %v538, %v1248
      %v1253 = vsub.f32 %v540, %v1249
      %v1254 = vsub.f32 %v544, %v1248
      %v1255 = vsub.f32 %v546, %v1249
      %v1256 = vsub.f32 %v548, %v1248
      %v1257 = vsub.f32 %v550, %v1249
      %v1258 = vmul.f32 %v1250, %v1250
      %v1259 = vmul.f32 %v1251, %v1251
      %v1260 = vmul.f32 %v1252, %v1252
      %v1261 = vmul.f32 %v1253, %v1253
      %v1262 = vmul.f32 %v1254, %v1254
      %v1263 = vmul.f32 %v1255, %v1255
      %v1264 = vmul.f32 %v1256, %v1256
      %v1265 = vmul.f32 %v1257, %v1257
      %v1266 = vadd.f32 %v1258, %v1260
      %v1267 = vadd.f32 %v1266, %v1262
      %v1268 = vadd.f32 %v1267, %v1264
      %v1269 = vrot.slane %v1268, 4
      %v1270 = vadd.f32 %v1268, %v1269
      %v1271 = vrot.slane %v1270, 2
      %v1272 = vadd.f32 %v1270, %v1271
      %v1273 = vrot.slane %v1272, 1
      %v1274 = vadd.f32 %v1272, %v1273
      %v1275 = vadd.f32 %v1259, %v1261
      %v1276 = vadd.f32 %v1275, %v1263
      %v1277 = vadd.f32 %v1276, %v1265
      %v1278 = vrot.slane %v1277, 4
      %v1279 = vadd.f32 %v1277, %v1278
      %v1280 = vrot.slane %v1279, 2
      %v1281 = vadd.f32 %v1279, %v1280
      %v1282 = vrot.slane %v1281, 1
      %v1283 = vadd.f32 %v1281, %v1282
      %v1284 = vmul.f32 %v1274, %v1247
      %v1285 = vmul.f32 %v1283, %v1247
      %v1286 = vadd.f32 %v1284, 1e-05
      %v1287 = vadd.f32 %v1285, 1e-05
      %v1288 = vrsqrt.pop %v1286
      %v1289 = vrsqrt.pop %v1287
      %v1290 = vmul.f32 %v1250, %v1288
      %v1291 = vmul.f32 %v1251, %v1289
      %v1292 = vmul.f32 %v1252, %v1288
      %v1293 = vmul.f32 %v1253, %v1289
      %v1294 = vmul.f32 %v1254, %v1288
      %v1295 = vmul.f32 %v1255, %v1289
      %v1296 = vmul.f32 %v1256, %v1288
      %v1297 = vmul.f32 %v1257, %v1289
      %v1298 = vld [vmem:[%s4] sm:$0xff]
      %v1299 = vld [vmem:[%s4 + $0x8] sm:$0xff]
      %v1300 = vld [vmem:[%s4 + $0x10] sm:$0xff]
      %v1301 = vld [vmem:[%s4 + $0x18] sm:$0xff]
      %1303 = vset.pattern.permute.xlu0 0
      %1304 = vperm.xlu0 %1303, %v1298
      %v1305 = vpop.permute.xlu0 %1304
      %1308 = vset.pattern.permute.xlu0 0
      %1309 = vperm.xlu0 %1308, %v1299
      %v1310 = vpop.permute.xlu0 %1309
      %1313 = vset.pattern.permute.xlu0 0
      %1314 = vperm.xlu0 %1313, %v1300
      %v1315 = vpop.permute.xlu0 %1314
      %1318 = vset.pattern.permute.xlu0 0
      %1319 = vperm.xlu0 %1318, %v1301
      %v1320 = vpop.permute.xlu0 %1319
      %v1322 = vmul.f32 %v1290, %v1305
      %v1323 = vmul.f32 %v1291, %v1305
      %v1324 = vmul.f32 %v1292, %v1310
      %v1325 = vmul.f32 %v1293, %v1310
      %v1326 = vmul.f32 %v1294, %v1315
      %v1327 = vmul.f32 %v1295, %v1315
      %v1328 = vmul.f32 %v1296, %v1320
      %v1329 = vmul.f32 %v1297, %v1320
      %v1330 = vld [vmem:[%s5] sm:$0xff]
      %v1331 = vld [vmem:[%s5 + $0x8] sm:$0xff]
      %v1332 = vld [vmem:[%s5 + $0x10] sm:$0xff]
      %v1333 = vld [vmem:[%s5 + $0x18] sm:$0xff]
      %1335 = vset.pattern.permute.xlu0 0
      %1336 = vperm.xlu0 %1335, %v1330
      %v1337 = vpop.permute.xlu0 %1336
      %1340 = vset.pattern.permute.xlu0 0
      %1341 = vperm.xlu0 %1340, %v1331
      %v1342 = vpop.permute.xlu0 %1341
      %1345 = vset.pattern.permute.xlu0 0
      %1346 = vperm.xlu0 %1345, %v1332
      %v1347 = vpop.permute.xlu0 %1346
      %1350 = vset.pattern.permute.xlu0 0
      %1351 = vperm.xlu0 %1350, %v1333
      %v1352 = vpop.permute.xlu0 %1351
      %v1354 = vadd.f32 %v1322, %v1337
      %v1355 = vadd.f32 %v1323, %v1337
      %v1356 = vadd.f32 %v1324, %v1342
      %v1357 = vadd.f32 %v1325, %v1342
      %v1358 = vadd.f32 %v1326, %v1347
      %v1359 = vadd.f32 %v1327, %v1347
      %v1360 = vadd.f32 %v1328, %v1352
      %v1361 = vadd.f32 %v1329, %v1352
      %v1362 = vld [vmem:[%s6] sm:$0xf]
      %v1363 = vld [vmem:[%s6 + $0x4] sm:$0xf]
      %v1364 = vld [vmem:[%s6 + $0x8] sm:$0xf]
      %v1365 = vld [vmem:[%s6 + $0xc] sm:$0xf]
      %v1366 = vld [vmem:[%s6 + $0x10] sm:$0xf]
      %v1367 = vld [vmem:[%s6 + $0x14] sm:$0xf]
      %v1368 = vld [vmem:[%s6 + $0x18] sm:$0xf]
      %v1369 = vld [vmem:[%s6 + $0x1c] sm:$0xf]
      %v1370 = vld [vmem:[%s6 + $0x20] sm:$0xf]
      %v1371 = vld [vmem:[%s6 + $0x24] sm:$0xf]
      %v1372 = vld [vmem:[%s6 + $0x28] sm:$0xf]
      %v1373 = vld [vmem:[%s6 + $0x2c] sm:$0xf]
      %v1374 = vld [vmem:[%s6 + $0x30] sm:$0xf]
      %v1375 = vld [vmem:[%s6 + $0x34] sm:$0xf]
      %v1376 = vld [vmem:[%s6 + $0x38] sm:$0xf]
      %v1377 = vld [vmem:[%s6 + $0x3c] sm:$0xf]
      %v1378 = vpack.c.bf16 %v1356, %v1354
      %v1379 = vpack.c.bf16 %v1357, %v1355
      %v1380 = vpack.c.bf16 %v1360, %v1358
      %v1381 = vpack.c.bf16 %v1361, %v1359
      %v1382 = vld [vmem:[%s7] sm:$0xff]
      %v1383 = vld [vmem:[%s7 + $0x8] sm:$0xff]
      %v1384 = vld [vmem:[%s7 + $0x10] sm:$0xff]
      %v1385 = vld [vmem:[%s7 + $0x18] sm:$0xff]
      %v1386 = vld [vmem:[%s7 + $0x20] sm:$0xff]
      %v1387 = vld [vmem:[%s7 + $0x28] sm:$0xff]
      %v1388 = vld [vmem:[%s7 + $0x30] sm:$0xff]
      %v1389 = vld [vmem:[%s7 + $0x38] sm:$0xff]
      %v1390 = vld [vmem:[%s7 + $0x40] sm:$0xff]
      %v1391 = vld [vmem:[%s7 + $0x48] sm:$0xff]
      %v1392 = vld [vmem:[%s7 + $0x50] sm:$0xff]
      %v1393 = vld [vmem:[%s7 + $0x58] sm:$0xff]
      %v1394 = vld [vmem:[%s7 + $0x60] sm:$0xff]
      %v1395 = vld [vmem:[%s7 + $0x68] sm:$0xff]
      %v1396 = vld [vmem:[%s7 + $0x70] sm:$0xff]
      %v1397 = vld [vmem:[%s7 + $0x78] sm:$0xff]
      %1399 = vset.pattern.permute.xlu0 0
      %1400 = vperm.xlu0 %1399, %v1382
      %v1401 = vpop.permute.xlu0 %1400
      %1404 = vset.pattern.permute.xlu0 0
      %1405 = vperm.xlu0 %1404, %v1383
      %v1406 = vpop.permute.xlu0 %1405
      %1409 = vset.pattern.permute.xlu0 0
      %1410 = vperm.xlu0 %1409, %v1384
      %v1411 = vpop.permute.xlu0 %1410
      %1414 = vset.pattern.permute.xlu0 0
      %1415 = vperm.xlu0 %1414, %v1385
      %v1416 = vpop.permute.xlu0 %1415
      %1419 = vset.pattern.permute.xlu0 0
      %1420 = vperm.xlu0 %1419, %v1386
      %v1421 = vpop.permute.xlu0 %1420
      %1424 = vset.pattern.permute.xlu0 0
      %1425 = vperm.xlu0 %1424, %v1387
      %v1426 = vpop.permute.xlu0 %1425
      %1429 = vset.pattern.permute.xlu0 0
      %1430 = vperm.xlu0 %1429, %v1388
      %v1431 = vpop.permute.xlu0 %1430
      %1434 = vset.pattern.permute.xlu0 0
      %1435 = vperm.xlu0 %1434, %v1389
      %v1436 = vpop.permute.xlu0 %1435
      %1439 = vset.pattern.permute.xlu0 0
      %1440 = vperm.xlu0 %1439, %v1390
      %v1441 = vpop.permute.xlu0 %1440
      %1444 = vset.pattern.permute.xlu0 0
      %1445 = vperm.xlu0 %1444, %v1391
      %v1446 = vpop.permute.xlu0 %1445
      %1449 = vset.pattern.permute.xlu0 0
      %1450 = vperm.xlu0 %1449, %v1392
      %v1451 = vpop.permute.xlu0 %1450
      %1454 = vset.pattern.permute.xlu0 0
      %1455 = vperm.xlu0 %1454, %v1393
      %v1456 = vpop.permute.xlu0 %1455
      %1459 = vset.pattern.permute.xlu0 0
      %1460 = vperm.xlu0 %1459, %v1394
      %v1461 = vpop.permute.xlu0 %1460
      %1464 = vset.pattern.permute.xlu0 0
      %1465 = vperm.xlu0 %1464, %v1395
      %v1466 = vpop.permute.xlu0 %1465
      %1469 = vset.pattern.permute.xlu0 0
      %1470 = vperm.xlu0 %1469, %v1396
      %v1471 = vpop.permute.xlu0 %1470
      %1474 = vset.pattern.permute.xlu0 0
      %1475 = vperm.xlu0 %1474, %v1397
      %v1476 = vpop.permute.xlu0 %1475
      %v1494 = vunpack.c.l.b16 %v1362
      %v1495 = vunpack.c.l.b16 %v1363
      %v1496 = vunpack.c.l.b16 %v1364
      %v1497 = vunpack.c.l.b16 %v1365
      %v1498 = vunpack.c.l.b16 %v1366
      %v1499 = vunpack.c.l.b16 %v1367
      %v1500 = vunpack.c.l.b16 %v1368
      %v1501 = vunpack.c.l.b16 %v1369
      %v1502 = vunpack.c.l.b16 %v1370
      %v1503 = vunpack.c.l.b16 %v1371
      %v1504 = vunpack.c.l.b16 %v1372
      %v1505 = vunpack.c.l.b16 %v1373
      %v1506 = vunpack.c.l.b16 %v1374
      %v1507 = vunpack.c.l.b16 %v1375
      %v1508 = vunpack.c.l.b16 %v1376
      %v1509 = vunpack.c.l.b16 %v1377
      %v1510 = vpack.c.b16 %v1495, %v1494
      %v1511 = vpack.c.b16 %v1497, %v1496
      %v1512 = vpack.c.b16 %v1499, %v1498
      %v1513 = vpack.c.b16 %v1501, %v1500
      %v1514 = vpack.c.b16 %v1503, %v1502
      %v1515 = vpack.c.b16 %v1505, %v1504
      %v1516 = vpack.c.b16 %v1507, %v1506
      %v1517 = vpack.c.b16 %v1509, %v1508
      %v1519 = vsel %vm492, %v1510, 0
      %v1522 = vsel %vm492, %v1511, 0
      %v1525 = vsel %vm492, %v1512, 0
      %v1528 = vsel %vm492, %v1513, 0
      %v1531 = vsel %vm492, %v1514, 0
      %v1534 = vsel %vm492, %v1515, 0
      %v1537 = vsel %vm492, %v1516, 0
      %v1540 = vsel %vm492, %v1517, 0
      %1542 = vmatprep.subr.bf16.mxu0 0
      %1543 = vmatpush1.bf16.msra.mxu0 0
      %1544 = vmatprep.subr.bf16.mxu0 0
      %1545 = vmatpush1.bf16.msra.mxu0 0
      %1546 = vmatprep.subr.bf16.mxu0 0
      %1547 = vmatpush1.bf16.msra.mxu0 0
      %1548 = vmatprep.subr.bf16.mxu0 0
      %1549 = vmatpush1.bf16.msra.mxu0 0
      %1550 = vmatprep.subr.bf16.mxu0 0
      %1551 = vmatpush1.bf16.msra.mxu0 0
      %1552 = vmatprep.subr.bf16.mxu0 0
      %1553 = vmatpush1.bf16.msra.mxu0 0
      %1554 = vmatprep.subr.bf16.mxu0 %v1381
      %1555 = vmatpush1.bf16.msra.mxu0 %v1380
      %1556 = vmatprep.subr.bf16.mxu0 %v1379
      %1557 = vmatpush1.bf16.msra.mxu0 %v1378
      %1558 = vmatprep.subr.bf16.mxu0 0
      %1559 = vmatpush2.bf16.msra.mxu0 0
      %1560 = vmatprep.subr.bf16.mxu0 0
      %1561 = vmatpush2.bf16.msra.mxu0 0
      %1562 = vmatprep.subr.bf16.mxu0 0
      %1563 = vmatpush2.bf16.msra.mxu0 0
      %1564 = vmatprep.subr.bf16.mxu0 0
      %1565 = vmatpush2.bf16.msra.mxu0 0
      %1566 = vmatprep.subr.bf16.mxu0 0
      %1567 = vmatpush2.bf16.msra.mxu0 0
      %1568 = vmatprep.subr.bf16.mxu0 0
      %1569 = vmatpush2.bf16.msra.mxu0 0
      %1570 = vmatprep.subr.bf16.mxu0 0
      %1571 = vmatpush2.bf16.msra.mxu0 0
      %1572 = vmatprep.subr.bf16.mxu0 0
      %1573 = vmatpush2.bf16.msra.mxu0 0
      %1574 = vmatprep.mubr.bf16.mxu0 0
      %1575 = vmatmul.mubr.bf16.gmra.mxu0 %v1519
      %v1576 = vpop.f32.mrf.mxu0
      %v1577 = vadd.f32 %v1401, %v1576
      %v1578 = vpop.f32.mrf.mxu0
      %v1579 = vadd.f32 %v1401, %v1578
      %v1580 = vpop.f32.mrf.mxu0
      %v1581 = vadd.f32 %v1406, %v1580
      %v1582 = vpop.f32.mrf.mxu0
      %v1583 = vadd.f32 %v1406, %v1582
      %1584 = vmatprep.mubr.bf16.mxu0 0
      %1585 = vmatmul.mubr.bf16.gmra.mxu0 %v1522
      %v1586 = vpop.f32.mrf.mxu0
      %v1587 = vadd.f32 %v1411, %v1586
      %v1588 = vpop.f32.mrf.mxu0
      %v1589 = vadd.f32 %v1411, %v1588
      %v1590 = vpop.f32.mrf.mxu0
      %v1591 = vadd.f32 %v1416, %v1590
      %v1592 = vpop.f32.mrf.mxu0
      %v1593 = vadd.f32 %v1416, %v1592
      %1594 = vmatprep.mubr.bf16.mxu0 0
      %1595 = vmatmul.mubr.bf16.gmra.mxu0 %v1525
      %v1596 = vpop.f32.mrf.mxu0
      %v1597 = vadd.f32 %v1421, %v1596
      %v1598 = vpop.f32.mrf.mxu0
      %v1599 = vadd.f32 %v1421, %v1598
      %v1600 = vpop.f32.mrf.mxu0
      %v1601 = vadd.f32 %v1426, %v1600
      %v1602 = vpop.f32.mrf.mxu0
      %v1603 = vadd.f32 %v1426, %v1602
      %1604 = vmatprep.mubr.bf16.mxu0 0
      %1605 = vmatmul.mubr.bf16.gmra.mxu0 %v1528
      %v1606 = vpop.f32.mrf.mxu0
      %v1607 = vadd.f32 %v1431, %v1606
      %v1608 = vpop.f32.mrf.mxu0
      %v1609 = vadd.f32 %v1431, %v1608
      %v1610 = vpop.f32.mrf.mxu0
      %v1611 = vadd.f32 %v1436, %v1610
      %v1612 = vpop.f32.mrf.mxu0
      %v1613 = vadd.f32 %v1436, %v1612
      %1614 = vmatprep.mubr.bf16.mxu0 0
      %1615 = vmatmul.mubr.bf16.gmra.mxu0 %v1531
      %v1616 = vpop.f32.mrf.mxu0
      %v1617 = vadd.f32 %v1441, %v1616
      %v1618 = vpop.f32.mrf.mxu0
      %v1619 = vadd.f32 %v1441, %v1618
      %v1620 = vpop.f32.mrf.mxu0
      %v1621 = vadd.f32 %v1446, %v1620
      %v1622 = vpop.f32.mrf.mxu0
      %v1623 = vadd.f32 %v1446, %v1622
      %1624 = vmatprep.mubr.bf16.mxu0 0
      %1625 = vmatmul.mubr.bf16.gmra.mxu0 %v1534
      %v1626 = vpop.f32.mrf.mxu0
      %v1627 = vadd.f32 %v1451, %v1626
      %v1628 = vpop.f32.mrf.mxu0
      %v1629 = vadd.f32 %v1451, %v1628
      %v1630 = vpop.f32.mrf.mxu0
      %v1631 = vadd.f32 %v1456, %v1630
      %v1632 = vpop.f32.mrf.mxu0
      %v1633 = vadd.f32 %v1456, %v1632
      %1634 = vmatprep.mubr.bf16.mxu0 0
      %1635 = vmatmul.mubr.bf16.gmra.mxu0 %v1537
      %v1636 = vpop.f32.mrf.mxu0
      %v1637 = vadd.f32 %v1461, %v1636
      %v1638 = vpop.f32.mrf.mxu0
      %v1639 = vadd.f32 %v1461, %v1638
      %v1640 = vpop.f32.mrf.mxu0
      %v1641 = vadd.f32 %v1466, %v1640
      %v1642 = vpop.f32.mrf.mxu0
      %v1643 = vadd.f32 %v1466, %v1642
      %1644 = vmatprep.mubr.bf16.mxu0 0
      %1645 = vmatmul.mubr.bf16.gmra.mxu0 %v1540
      %v1646 = vpop.f32.mrf.mxu0
      %v1647 = vadd.f32 %v1471, %v1646
      %v1648 = vpop.f32.mrf.mxu0
      %v1649 = vadd.f32 %v1471, %v1648
      %v1650 = vpop.f32.mrf.mxu0
      %v1651 = vadd.f32 %v1476, %v1650
      %v1652 = vpop.f32.mrf.mxu0
      %v1653 = vadd.f32 %v1476, %v1652
      %1654 = vdwg.mxu0
      %v1655 = vxor.u32 %v1577, 2147483648
      %v1656 = vxor.u32 %v1579, 2147483648
      %v1657 = vxor.u32 %v1581, 2147483648
      %v1658 = vxor.u32 %v1583, 2147483648
      %v1659 = vxor.u32 %v1587, 2147483648
      %v1660 = vxor.u32 %v1589, 2147483648
      %v1661 = vxor.u32 %v1591, 2147483648
      %v1662 = vxor.u32 %v1593, 2147483648
      %v1663 = vxor.u32 %v1597, 2147483648
      %v1664 = vxor.u32 %v1599, 2147483648
      %v1665 = vxor.u32 %v1601, 2147483648
      %v1666 = vxor.u32 %v1603, 2147483648
      %v1667 = vxor.u32 %v1607, 2147483648
      %v1668 = vxor.u32 %v1609, 2147483648
      %v1669 = vxor.u32 %v1611, 2147483648
      %v1670 = vxor.u32 %v1613, 2147483648
      %v1671 = vxor.u32 %v1617, 2147483648
      %v1672 = vxor.u32 %v1619, 2147483648
      %v1673 = vxor.u32 %v1621, 2147483648
      %v1674 = vxor.u32 %v1623, 2147483648
      %v1675 = vxor.u32 %v1627, 2147483648
      %v1676 = vxor.u32 %v1629, 2147483648
      %v1677 = vxor.u32 %v1631, 2147483648
      %v1678 = vxor.u32 %v1633, 2147483648
      %v1679 = vxor.u32 %v1637, 2147483648
      %v1680 = vxor.u32 %v1639, 2147483648
      %v1681 = vxor.u32 %v1641, 2147483648
      %v1682 = vxor.u32 %v1643, 2147483648
      %v1683 = vxor.u32 %v1647, 2147483648
      %v1684 = vxor.u32 %v1649, 2147483648
      %v1685 = vxor.u32 %v1651, 2147483648
      %v1686 = vxor.u32 %v1653, 2147483648
      %v1687 = vmul.f32 %v1655, 1.442695
      %v1688 = vpow.pop %v1687
      %v1689 = vmul.f32 %v1656, 1.442695
      %v1690 = vpow.pop %v1689
      %v1691 = vmul.f32 %v1657, 1.442695
      %v1692 = vpow.pop %v1691
      %v1693 = vmul.f32 %v1658, 1.442695
      %v1694 = vpow.pop %v1693
      %v1695 = vmul.f32 %v1659, 1.442695
      %v1696 = vpow.pop %v1695
      %v1697 = vmul.f32 %v1660, 1.442695
      %v1698 = vpow.pop %v1697
      %v1699 = vmul.f32 %v1661, 1.442695
      %v1700 = vpow.pop %v1699
      %v1701 = vmul.f32 %v1662, 1.442695
      %v1702 = vpow.pop %v1701
      %v1703 = vmul.f32 %v1663, 1.442695
      %v1704 = vpow.pop %v1703
      %v1705 = vmul.f32 %v1664, 1.442695
      %v1706 = vpow.pop %v1705
      %v1707 = vmul.f32 %v1665, 1.442695
      %v1708 = vpow.pop %v1707
      %v1709 = vmul.f32 %v1666, 1.442695
      %v1710 = vpow.pop %v1709
      %v1711 = vmul.f32 %v1667, 1.442695
      %v1712 = vpow.pop %v1711
      %v1713 = vmul.f32 %v1668, 1.442695
      %v1714 = vpow.pop %v1713
      %v1715 = vmul.f32 %v1669, 1.442695
      %v1716 = vpow.pop %v1715
      %v1717 = vmul.f32 %v1670, 1.442695
      %v1718 = vpow.pop %v1717
      %v1719 = vmul.f32 %v1671, 1.442695
      %v1720 = vpow.pop %v1719
      %v1721 = vmul.f32 %v1672, 1.442695
      %v1722 = vpow.pop %v1721
      %v1723 = vmul.f32 %v1673, 1.442695
      %v1724 = vpow.pop %v1723
      %v1725 = vmul.f32 %v1674, 1.442695
      %v1726 = vpow.pop %v1725
      %v1727 = vmul.f32 %v1675, 1.442695
      %v1728 = vpow.pop %v1727
      %v1729 = vmul.f32 %v1676, 1.442695
      %v1730 = vpow.pop %v1729
      %v1731 = vmul.f32 %v1677, 1.442695
      %v1732 = vpow.pop %v1731
      %v1733 = vmul.f32 %v1678, 1.442695
      %v1734 = vpow.pop %v1733
      %v1735 = vmul.f32 %v1679, 1.442695
      %v1736 = vpow.pop %v1735
      %v1737 = vmul.f32 %v1680, 1.442695
      %v1738 = vpow.pop %v1737
      %v1739 = vmul.f32 %v1681, 1.442695
      %v1740 = vpow.pop %v1739
      %v1741 = vmul.f32 %v1682, 1.442695
      %v1742 = vpow.pop %v1741
      %v1743 = vmul.f32 %v1683, 1.442695
      %v1744 = vpow.pop %v1743
      %v1745 = vmul.f32 %v1684, 1.442695
      %v1746 = vpow.pop %v1745
      %v1747 = vmul.f32 %v1685, 1.442695
      %v1748 = vpow.pop %v1747
      %v1749 = vmul.f32 %v1686, 1.442695
      %v1750 = vpow.pop %v1749
      %v1751 = vadd.f32 %v1688, 1.0
      %v1752 = vadd.f32 %v1690, 1.0
      %v1753 = vadd.f32 %v1692, 1.0
      %v1754 = vadd.f32 %v1694, 1.0
      %v1755 = vadd.f32 %v1696, 1.0
      %v1756 = vadd.f32 %v1698, 1.0
      %v1757 = vadd.f32 %v1700, 1.0
      %v1758 = vadd.f32 %v1702, 1.0
      %v1759 = vadd.f32 %v1704, 1.0
      %v1760 = vadd.f32 %v1706, 1.0
      %v1761 = vadd.f32 %v1708, 1.0
      %v1762 = vadd.f32 %v1710, 1.0
      %v1763 = vadd.f32 %v1712, 1.0
      %v1764 = vadd.f32 %v1714, 1.0
      %v1765 = vadd.f32 %v1716, 1.0
      %v1766 = vadd.f32 %v1718, 1.0
      %v1767 = vadd.f32 %v1720, 1.0
      %v1768 = vadd.f32 %v1722, 1.0
      %v1769 = vadd.f32 %v1724, 1.0
      %v1770 = vadd.f32 %v1726, 1.0
      %v1771 = vadd.f32 %v1728, 1.0
      %v1772 = vadd.f32 %v1730, 1.0
      %v1773 = vadd.f32 %v1732, 1.0
      %v1774 = vadd.f32 %v1734, 1.0
      %v1775 = vadd.f32 %v1736, 1.0
      %v1776 = vadd.f32 %v1738, 1.0
      %v1777 = vadd.f32 %v1740, 1.0
      %v1778 = vadd.f32 %v1742, 1.0
      %v1779 = vadd.f32 %v1744, 1.0
      %v1780 = vadd.f32 %v1746, 1.0
      %v1781 = vadd.f32 %v1748, 1.0
      %v1782 = vadd.f32 %v1750, 1.0
      %v1783 = vrcp.pop %v1751
      %v1784 = vmul.f32 1.0, %v1783
      %v1785 = vrcp.pop %v1752
      %v1786 = vmul.f32 1.0, %v1785
      %v1787 = vrcp.pop %v1753
      %v1788 = vmul.f32 1.0, %v1787
      %v1789 = vrcp.pop %v1754
      %v1790 = vmul.f32 1.0, %v1789
      %v1791 = vrcp.pop %v1755
      %v1792 = vmul.f32 1.0, %v1791
      %v1793 = vrcp.pop %v1756
      %v1794 = vmul.f32 1.0, %v1793
      %v1795 = vrcp.pop %v1757
      %v1796 = vmul.f32 1.0, %v1795
      %v1797 = vrcp.pop %v1758
      %v1798 = vmul.f32 1.0, %v1797
      %v1799 = vrcp.pop %v1759
      %v1800 = vmul.f32 1.0, %v1799
      %v1801 = vrcp.pop %v1760
      %v1802 = vmul.f32 1.0, %v1801
      %v1803 = vrcp.pop %v1761
      %v1804 = vmul.f32 1.0, %v1803
      %v1805 = vrcp.pop %v1762
      %v1806 = vmul.f32 1.0, %v1805
      %v1807 = vrcp.pop %v1763
      %v1808 = vmul.f32 1.0, %v1807
      %v1809 = vrcp.pop %v1764
      %v1810 = vmul.f32 1.0, %v1809
      %v1811 = vrcp.pop %v1765
      %v1812 = vmul.f32 1.0, %v1811
      %v1813 = vrcp.pop %v1766
      %v1814 = vmul.f32 1.0, %v1813
      %v1815 = vrcp.pop %v1767
      %v1816 = vmul.f32 1.0, %v1815
      %v1817 = vrcp.pop %v1768
      %v1818 = vmul.f32 1.0, %v1817
      %v1819 = vrcp.pop %v1769
      %v1820 = vmul.f32 1.0, %v1819
      %v1821 = vrcp.pop %v1770
      %v1822 = vmul.f32 1.0, %v1821
      %v1823 = vrcp.pop %v1771
      %v1824 = vmul.f32 1.0, %v1823
      %v1825 = vrcp.pop %v1772
      %v1826 = vmul.f32 1.0, %v1825
      %v1827 = vrcp.pop %v1773
      %v1828 = vmul.f32 1.0, %v1827
      %v1829 = vrcp.pop %v1774
      %v1830 = vmul.f32 1.0, %v1829
      %v1831 = vrcp.pop %v1775
      %v1832 = vmul.f32 1.0, %v1831
      %v1833 = vrcp.pop %v1776
      %v1834 = vmul.f32 1.0, %v1833
      %v1835 = vrcp.pop %v1777
      %v1836 = vmul.f32 1.0, %v1835
      %v1837 = vrcp.pop %v1778
      %v1838 = vmul.f32 1.0, %v1837
      %v1839 = vrcp.pop %v1779
      %v1840 = vmul.f32 1.0, %v1839
      %v1841 = vrcp.pop %v1780
      %v1842 = vmul.f32 1.0, %v1841
      %v1843 = vrcp.pop %v1781
      %v1844 = vmul.f32 1.0, %v1843
      %v1845 = vrcp.pop %v1782
      %v1846 = vmul.f32 1.0, %v1845
      %v1847 = vmul.f32 %v1577, %v1784
      %v1848 = vmul.f32 %v1579, %v1786
      %v1849 = vmul.f32 %v1581, %v1788
      %v1850 = vmul.f32 %v1583, %v1790
      %v1851 = vmul.f32 %v1587, %v1792
      %v1852 = vmul.f32 %v1589, %v1794
      %v1853 = vmul.f32 %v1591, %v1796
      %v1854 = vmul.f32 %v1593, %v1798
      %v1855 = vmul.f32 %v1597, %v1800
      %v1856 = vmul.f32 %v1599, %v1802
      %v1857 = vmul.f32 %v1601, %v1804
      %v1858 = vmul.f32 %v1603, %v1806
      %v1859 = vmul.f32 %v1607, %v1808
      %v1860 = vmul.f32 %v1609, %v1810
      %v1861 = vmul.f32 %v1611, %v1812
      %v1862 = vmul.f32 %v1613, %v1814
      %v1863 = vmul.f32 %v1617, %v1816
      %v1864 = vmul.f32 %v1619, %v1818
      %v1865 = vmul.f32 %v1621, %v1820
      %v1866 = vmul.f32 %v1623, %v1822
      %v1867 = vmul.f32 %v1627, %v1824
      %v1868 = vmul.f32 %v1629, %v1826
      %v1869 = vmul.f32 %v1631, %v1828
      %v1870 = vmul.f32 %v1633, %v1830
      %v1871 = vmul.f32 %v1637, %v1832
      %v1872 = vmul.f32 %v1639, %v1834
      %v1873 = vmul.f32 %v1641, %v1836
      %v1874 = vmul.f32 %v1643, %v1838
      %v1875 = vmul.f32 %v1647, %v1840
      %v1876 = vmul.f32 %v1649, %v1842
      %v1877 = vmul.f32 %v1651, %v1844
      %v1878 = vmul.f32 %v1653, %v1846
      %v1879 = vld [vmem:[%s8] sm:$0xf]
      %v1880 = vld [vmem:[%s8 + $0x4] sm:$0xf]
      %v1881 = vld [vmem:[%s8 + $0x8] sm:$0xf]
      %v1882 = vld [vmem:[%s8 + $0xc] sm:$0xf]
      %v1883 = vpack.c.bf16 %v1849, %v1847
      %v1884 = vpack.c.bf16 %v1850, %v1848
      %v1885 = vpack.c.bf16 %v1853, %v1851
      %v1886 = vpack.c.bf16 %v1854, %v1852
      %v1887 = vpack.c.bf16 %v1857, %v1855
      %v1888 = vpack.c.bf16 %v1858, %v1856
      %v1889 = vpack.c.bf16 %v1861, %v1859
      %v1890 = vpack.c.bf16 %v1862, %v1860
      %v1891 = vpack.c.bf16 %v1865, %v1863
      %v1892 = vpack.c.bf16 %v1866, %v1864
      %v1893 = vpack.c.bf16 %v1869, %v1867
      %v1894 = vpack.c.bf16 %v1870, %v1868
      %v1895 = vpack.c.bf16 %v1873, %v1871
      %v1896 = vpack.c.bf16 %v1874, %v1872
      %v1897 = vpack.c.bf16 %v1877, %v1875
      %v1898 = vpack.c.bf16 %v1878, %v1876
      %v1899 = vld [vmem:[%s9] sm:$0xff]
      %v1900 = vld [vmem:[%s9 + $0x8] sm:$0xff]
      %v1901 = vld [vmem:[%s9 + $0x10] sm:$0xff]
      %v1902 = vld [vmem:[%s9 + $0x18] sm:$0xff]
      %1904 = vset.pattern.permute.xlu0 0
      %1905 = vperm.xlu0 %1904, %v1899
      %v1906 = vpop.permute.xlu0 %1905
      %1909 = vset.pattern.permute.xlu0 0
      %1910 = vperm.xlu0 %1909, %v1900
      %v1911 = vpop.permute.xlu0 %1910
      %1914 = vset.pattern.permute.xlu0 0
      %1915 = vperm.xlu0 %1914, %v1901
      %v1916 = vpop.permute.xlu0 %1915
      %1919 = vset.pattern.permute.xlu0 0
      %1920 = vperm.xlu0 %1919, %v1902
      %v1921 = vpop.permute.xlu0 %1920
      %v1927 = vunpack.c.l.b16 %v1879
      %v1928 = vunpack.c.l.b16 %v1880
      %v1929 = vunpack.c.l.b16 %v1881
      %v1930 = vunpack.c.l.b16 %v1882
      %v1931 = vpack.c.b16 %v1928, %v1927
      %v1932 = vpack.c.b16 %v1930, %v1929
      %1935 = vmatprep.subr.bf16.mxu0 %v1898
      %1936 = vmatpush1.bf16.msra.mxu0 %v1897
      %1937 = vmatprep.subr.bf16.mxu0 %v1896
      %1938 = vmatpush1.bf16.msra.mxu0 %v1895
      %1939 = vmatprep.subr.bf16.mxu0 %v1894
      %1940 = vmatpush1.bf16.msra.mxu0 %v1893
      %1941 = vmatprep.subr.bf16.mxu0 %v1892
      %1942 = vmatpush1.bf16.msra.mxu0 %v1891
      %1943 = vmatprep.subr.bf16.mxu0 %v1890
      %1944 = vmatpush1.bf16.msra.mxu0 %v1889
      %1945 = vmatprep.subr.bf16.mxu0 %v1888
      %1946 = vmatpush1.bf16.msra.mxu0 %v1887
      %1947 = vmatprep.subr.bf16.mxu0 %v1886
      %1948 = vmatpush1.bf16.msra.mxu0 %v1885
      %1949 = vmatprep.subr.bf16.mxu0 %v1884
      %1950 = vmatpush1.bf16.msra.mxu0 %v1883
      %1951 = vmatprep.subr.bf16.mxu0 0
      %1952 = vmatpush2.bf16.msra.mxu0 0
      %1953 = vmatprep.subr.bf16.mxu0 0
      %1954 = vmatpush2.bf16.msra.mxu0 0
      %1955 = vmatprep.subr.bf16.mxu0 0
      %1956 = vmatpush2.bf16.msra.mxu0 0
      %1957 = vmatprep.subr.bf16.mxu0 0
      %1958 = vmatpush2.bf16.msra.mxu0 0
      %1959 = vmatprep.subr.bf16.mxu0 0
      %1960 = vmatpush2.bf16.msra.mxu0 0
      %1961 = vmatprep.subr.bf16.mxu0 0
      %1962 = vmatpush2.bf16.msra.mxu0 0
      %1963 = vmatprep.subr.bf16.mxu0 0
      %1964 = vmatpush2.bf16.msra.mxu0 0
      %1965 = vmatprep.subr.bf16.mxu0 0
      %1966 = vmatpush2.bf16.msra.mxu0 0
      %1967 = vmatprep.mubr.bf16.mxu0 0
      %1968 = vmatmul.mubr.bf16.gmra.mxu0 %v1931
      %v1969 = vpop.f32.mrf.mxu0
      %v1970 = vadd.f32 %v1906, %v1969
      %v1971 = vpop.f32.mrf.mxu0
      %v1972 = vadd.f32 %v1906, %v1971
      %v1973 = vpop.f32.mrf.mxu0
      %v1974 = vadd.f32 %v1911, %v1973
      %v1975 = vpop.f32.mrf.mxu0
      %v1976 = vadd.f32 %v1911, %v1975
      %1977 = vmatprep.mubr.bf16.mxu0 0
      %1978 = vmatmul.mubr.bf16.gmra.mxu0 %v1932
      %v1979 = vpop.f32.mrf.mxu0
      %v1980 = vadd.f32 %v1916, %v1979
      %v1981 = vpop.f32.mrf.mxu0
      %v1982 = vadd.f32 %v1916, %v1981
      %v1983 = vpop.f32.mrf.mxu0
      %v1984 = vadd.f32 %v1921, %v1983
      %v1985 = vpop.f32.mrf.mxu0
      %v1986 = vadd.f32 %v1921, %v1985
      %1987 = vdwg.mxu0
      %v1988 = vadd.f32 %v1221, %v1970
      %v1989 = vadd.f32 %v1222, %v1972
      %v1990 = vadd.f32 %v1223, %v1974
      %v1991 = vadd.f32 %v1224, %v1976
      %v1992 = vadd.f32 %v1225, %v1980
      %v1993 = vadd.f32 %v1226, %v1982
      %v1994 = vadd.f32 %v1227, %v1984
      %v1995 = vadd.f32 %v1228, %v1986
      %v1996 = vld [vmem:[%s11] sm:$0xf]
      %v1997 = vld [vmem:[%s11 + $0x4] sm:$0xf]
      %v1998 = vld [vmem:[%s11 + $0x8] sm:$0xf]
      %v1999 = vld [vmem:[%s11 + $0xc] sm:$0xf]
      %v2000 = vpack.c.bf16 %v1990, %v1988
      %v2001 = vpack.c.bf16 %v1991, %v1989
      %v2002 = vpack.c.bf16 %v1994, %v1992
      %v2003 = vpack.c.bf16 %v1995, %v1993
      %v2004 = vld [vmem:[%s12] sm:$0xff]
      %v2005 = vld [vmem:[%s12 + $0x8] sm:$0xff]
      %v2006 = vld [vmem:[%s12 + $0x10] sm:$0xff]
      %v2007 = vld [vmem:[%s12 + $0x18] sm:$0xff]
      %2009 = vset.pattern.permute.xlu0 0
      %2010 = vperm.xlu0 %2009, %v2004
      %v2011 = vpop.permute.xlu0 %2010
      %2014 = vset.pattern.permute.xlu0 0
      %2015 = vperm.xlu0 %2014, %v2005
      %v2016 = vpop.permute.xlu0 %2015
      %2019 = vset.pattern.permute.xlu0 0
      %2020 = vperm.xlu0 %2019, %v2006
      %v2021 = vpop.permute.xlu0 %2020
      %2024 = vset.pattern.permute.xlu0 0
      %2025 = vperm.xlu0 %2024, %v2007
      %v2026 = vpop.permute.xlu0 %2025
      %v2032 = vunpack.c.l.b16 %v1996
      %v2033 = vunpack.c.l.b16 %v1997
      %v2034 = vunpack.c.l.b16 %v1998
      %v2035 = vunpack.c.l.b16 %v1999
      %v2036 = vpack.c.b16 %v2033, %v2032
      %v2037 = vpack.c.b16 %v2035, %v2034
      %v2039 = vsel %vm492, %v2036, 0
      %v2042 = vsel %vm492, %v2037, 0
      %2044 = vmatprep.subr.bf16.mxu0 0
      %2045 = vmatpush1.bf16.msra.mxu0 0
      %2046 = vmatprep.subr.bf16.mxu0 0
      %2047 = vmatpush1.bf16.msra.mxu0 0
      %2048 = vmatprep.subr.bf16.mxu0 0
      %2049 = vmatpush1.bf16.msra.mxu0 0
      %2050 = vmatprep.subr.bf16.mxu0 0
      %2051 = vmatpush1.bf16.msra.mxu0 0
      %2052 = vmatprep.subr.bf16.mxu0 0
      %2053 = vmatpush1.bf16.msra.mxu0 0
      %2054 = vmatprep.subr.bf16.mxu0 0
      %2055 = vmatpush1.bf16.msra.mxu0 0
      %2056 = vmatprep.subr.bf16.mxu0 %v2003
      %2057 = vmatpush1.bf16.msra.mxu0 %v2002
      %2058 = vmatprep.subr.bf16.mxu0 %v2001
      %2059 = vmatpush1.bf16.msra.mxu0 %v2000
      %2060 = vmatprep.subr.bf16.mxu0 0
      %2061 = vmatpush2.bf16.msra.mxu0 0
      %2062 = vmatprep.subr.bf16.mxu0 0
      %2063 = vmatpush2.bf16.msra.mxu0 0
      %2064 = vmatprep.subr.bf16.mxu0 0
      %2065 = vmatpush2.bf16.msra.mxu0 0
      %2066 = vmatprep.subr.bf16.mxu0 0
      %2067 = vmatpush2.bf16.msra.mxu0 0
      %2068 = vmatprep.subr.bf16.mxu0 0
      %2069 = vmatpush2.bf16.msra.mxu0 0
      %2070 = vmatprep.subr.bf16.mxu0 0
      %2071 = vmatpush2.bf16.msra.mxu0 0
      %2072 = vmatprep.subr.bf16.mxu0 0
      %2073 = vmatpush2.bf16.msra.mxu0 0
      %2074 = vmatprep.subr.bf16.mxu0 0
      %2075 = vmatpush2.bf16.msra.mxu0 0
      %2076 = vmatprep.mubr.bf16.mxu0 0
      %2077 = vmatmul.mubr.bf16.gmra.mxu0 %v2039
      %v2078 = vpop.f32.mrf.mxu0
      %v2079 = vadd.f32 %v2011, %v2078
      %v2080 = vpop.f32.mrf.mxu0
      %v2081 = vadd.f32 %v2011, %v2080
      %v2082 = vpop.f32.mrf.mxu0
      %v2083 = vadd.f32 %v2016, %v2082
      %v2084 = vpop.f32.mrf.mxu0
      %v2085 = vadd.f32 %v2016, %v2084
      %2086 = vmatprep.mubr.bf16.mxu0 0
      %2087 = vmatmul.mubr.bf16.gmra.mxu0 %v2042
      %v2088 = vpop.f32.mrf.mxu0
      %v2089 = vadd.f32 %v2021, %v2088
      %v2090 = vpop.f32.mrf.mxu0
      %v2091 = vadd.f32 %v2021, %v2090
      %v2092 = vpop.f32.mrf.mxu0
      %v2093 = vadd.f32 %v2026, %v2092
      %v2094 = vpop.f32.mrf.mxu0
      %v2095 = vadd.f32 %v2026, %v2094
      %2096 = vdwg.mxu0
      %v2097 = vmul.f32 %v534, 2.0
      %v2098 = vmul.f32 %v536, 2.0
      %v2099 = vmul.f32 %v538, 2.0
      %v2100 = vmul.f32 %v540, 2.0
      %v2101 = vmul.f32 %v544, 2.0
      %v2102 = vmul.f32 %v546, 2.0
      %v2103 = vmul.f32 %v548, 2.0
      %v2104 = vmul.f32 %v550, 2.0
      %v2105 = vpack.c.bf16 %v2083, %v2079
      %v2106 = vpack.c.bf16 %v2085, %v2081
      %v2107 = vpack.c.bf16 %v2093, %v2089
      %v2108 = vpack.c.bf16 %v2095, %v2091
      %2109 = vmatprep.subr.bf16.mxu0 0
      %2110 = vmatpush1.bf16.msra.mxu0 0
      %2111 = vmatprep.subr.bf16.mxu0 0
      %2112 = vmatpush1.bf16.msra.mxu0 0
      %2113 = vmatprep.subr.bf16.mxu0 0
      %2114 = vmatpush1.bf16.msra.mxu0 0
      %2115 = vmatprep.subr.bf16.mxu0 0
      %2116 = vmatpush1.bf16.msra.mxu0 0
      %2117 = vmatprep.subr.bf16.mxu0 0
      %2118 = vmatpush1.bf16.msra.mxu0 0
      %2119 = vmatprep.subr.bf16.mxu0 0
      %2120 = vmatpush1.bf16.msra.mxu0 0
      %2121 = vmatprep.subr.bf16.mxu0 %v2108
      %2122 = vmatpush1.bf16.msra.mxu0 %v2107
      %2123 = vmatprep.subr.bf16.mxu0 %v2106
      %2124 = vmatpush1.bf16.msra.mxu0 %v2105
      %2125 = vmatprep.subr.bf16.mxu0 0
      %2126 = vmatpush2.bf16.msra.mxu0 0
      %2127 = vmatprep.subr.bf16.mxu0 0
      %2128 = vmatpush2.bf16.msra.mxu0 0
      %2129 = vmatprep.subr.bf16.mxu0 0
      %2130 = vmatpush2.bf16.msra.mxu0 0
      %2131 = vmatprep.subr.bf16.mxu0 0
      %2132 = vmatpush2.bf16.msra.mxu0 0
      %2133 = vmatprep.subr.bf16.mxu0 0
      %2134 = vmatpush2.bf16.msra.mxu0 0
      %2135 = vmatprep.subr.bf16.mxu0 0
      %2136 = vmatpush2.bf16.msra.mxu0 0
      %2137 = vmatprep.subr.bf16.mxu0 0
      %2138 = vmatpush2.bf16.msra.mxu0 0
      %2139 = vmatprep.subr.bf16.mxu0 0
      %2140 = vmatpush2.bf16.msra.mxu0 0
      %2141 = vmatprep.mubr.bf16.mxu0 0
      %2142 = vmatmul.mubr.bf16.gmra.mxu0 %v494
      %v2143 = vpop.f32.mrf.mxu0
      %v2144 = vadd.f32 0.0, %v2143
      %v2145 = vpop.f32.mrf.mxu0
      %v2146 = vadd.f32 0.0, %v2145
      %v2147 = vpop.f32.mrf.mxu0
      %v2148 = vadd.f32 0.0, %v2147
      %v2149 = vpop.f32.mrf.mxu0
      %v2150 = vadd.f32 0.0, %v2149
      %2151 = vmatprep.mubr.bf16.mxu0 0
      %2152 = vmatmul.mubr.bf16.gmra.mxu0 %v497
      %v2153 = vpop.f32.mrf.mxu0
      %v2154 = vadd.f32 0.0, %v2153
      %v2155 = vpop.f32.mrf.mxu0
      %v2156 = vadd.f32 0.0, %v2155
      %v2157 = vpop.f32.mrf.mxu0
      %v2158 = vadd.f32 0.0, %v2157
      %v2159 = vpop.f32.mrf.mxu0
      %v2160 = vadd.f32 0.0, %v2159
      %2161 = vdwg.mxu0
      %v2162 = vadd.f32 %v2097, %v2144
      %v2163 = vadd.f32 %v2098, %v2146
      %v2164 = vadd.f32 %v2099, %v2148
      %v2165 = vadd.f32 %v2100, %v2150
      %v2166 = vadd.f32 %v2101, %v2154
      %v2167 = vadd.f32 %v2102, %v2156
      %v2168 = vadd.f32 %v2103, %v2158
      %v2169 = vadd.f32 %v2104, %v2160
      %v2170 = vld [vmem:[%s3] sm:$0xff]
      %v2171 = vld [vmem:[%s3 + $0x8] sm:$0xff]
      %v2172 = vld [vmem:[%s3 + $0x10] sm:$0xff]
      %v2173 = vld [vmem:[%s3 + $0x18] sm:$0xff]
      %2175 = vset.pattern.permute.xlu0 0
      %2176 = vperm.xlu0 %2175, %v2170
      %v2177 = vpop.permute.xlu0 %2176
      %2180 = vset.pattern.permute.xlu0 0
      %2181 = vperm.xlu0 %2180, %v2171
      %v2182 = vpop.permute.xlu0 %2181
      %2185 = vset.pattern.permute.xlu0 0
      %2186 = vperm.xlu0 %2185, %v2172
      %v2187 = vpop.permute.xlu0 %2186
      %2190 = vset.pattern.permute.xlu0 0
      %2191 = vperm.xlu0 %2190, %v2173
      %v2192 = vpop.permute.xlu0 %2191
      %v2194 = vadd.f32 %v2162, %v2177
      %v2195 = vadd.f32 %v2163, %v2177
      %v2196 = vadd.f32 %v2164, %v2182
      %v2197 = vadd.f32 %v2165, %v2182
      %v2198 = vadd.f32 %v2166, %v2187
      %v2199 = vadd.f32 %v2167, %v2187
      %v2200 = vadd.f32 %v2168, %v2192
      %v2201 = vadd.f32 %v2169, %v2192
      %2202 = vst [vmem:[%s440] sm:$0xff] %v2194
      %2203 = vst [vmem:[%s440 + $0x8] sm:$0xff] %v2195
      %2204 = vst [vmem:[%s440 + $0x10] sm:$0xff] %v2196
      %2205 = vst [vmem:[%s440 + $0x18] sm:$0xff] %v2197
      %2206 = vst [vmem:[%s440 + $0x20] sm:$0xff] %v2198
      %2207 = vst [vmem:[%s440 + $0x28] sm:$0xff] %v2199
      %2208 = vst [vmem:[%s440 + $0x30] sm:$0xff] %v2200
      %2209 = vst [vmem:[%s440 + $0x38] sm:$0xff] %v2201
      %p2210 = scmp.lt.s32.totalorder %s24, 1
      %s2211 = scalar_select %p2210, %s24, 1
      %s2212 = smul.addr %s2211, 8
      %s2213 = smul.addr %s2212, 8
      %s2214 = scalar_lea.vmem %s13, %s2213
      // Predicated region
      $region73: #{resst_forward.1} parent=71 // pred_check
        %p2215 = pneg %p320
      $region74: #{resst_forward.1} parent=71 // pred_check_branch
        %2217 = sbr.rel (%p2215) target = $region76
      $region75: #{resst_forward.1} parent=71 // pred_region
        _
      $region76: #{resst_forward.1} parent=71 // pred_fallthru
        _
    $region72: #{resst_forward.1} parent=5 // pred_fallthru
      _
    %p2218 = scmp.le.s32.totalorder 2, %s19
    // Predicated region
    $region77: #{resst_forward.1} parent=5 // pred_check
      %p2219 = pneg %p2218
    $region78: #{resst_forward.1} parent=5 // pred_check_branch
      %2221 = sbr.rel (%p2219) target = $region80
    $region79: #{resst_forward.1} parent=5 // pred_region
      %s2222 = ssub.s32 %s19, 2
      // Predicated region
      $region81: #{resst_forward.1} parent=79 // pred_check
        %p2223 = pneg %p326
      $region82: #{resst_forward.1} parent=79 // pred_check_branch
        %2225 = sbr.rel (%p2223) target = $region84
      $region83: #{resst_forward.1} parent=79 // pred_region
        %p2226 = scmp.lt.s32.totalorder %s25, 1
        %s2227 = scalar_select %p2226, %s25, 1
        %s2228 = smul.addr %s2227, 8
        %s2229 = smul.addr %s2228, 8
        %s2230 = scalar_lea.vmem %s13, %s2229
      $region84: #{resst_forward.1} parent=79 // pred_fallthru
        _
    $region80: #{resst_forward.1} parent=5 // pred_fallthru
      _
  $region6: #{resst_forward.1} parent=0 // loop_footer
    %s23 = sadd.s32 1, %s19
  $region7: #{resst_forward.1} parent=0 // loop_footer_branch
    %18 = sbr.rel target = $region3
  $region8: #{resst_forward.1} parent=0 // loop_exit
    _

</llo_original>
